<compile_context>
chip_gen: v6e
topology: v6e:2x2x1
jax: 0.10.0
libtpu: 0.0.40
codegen_flags: <defaults>
</compile_context>

<pallas_src>
import jax
import jax.numpy as jnp
from jax import lax
from jax.experimental import pallas as pl
from jax.experimental.pallas import tpu as pltpu

BOARD_EMB_NUM = 10            # board_embedding_num
BOARD_EMB_DIM = 14            # board_embedding_dim
EXTRA_EMB_NUM = 2 * BOARD_EMB_NUM   # 20
EXTRA_EMB_DIM = 7             # extrainfo_embedding
EXTRA_TOKENS = 7              # x[:, 1, 0, 35:42] -> 7 tokens per batch


def _board_embed_kernel(codes_ref, table_t_ref, out_ref):
    """Embed a block of TB whole boards in one step.

    codes_ref  : (TB, 1, N) f32  board codes (N = H*W, lane-dense)
    table_t_ref: (14, 10)   f32  board embedding table, transposed (resident
                                 across all grid steps: constant index map)
    out_ref    : (TB, 14, N) f32 channel-major board embedding (== NCHW flat)
    """
    tb, _, n = codes_ref.shape
    emb_dim, num_cls = table_t_ref.shape

    # torch `.long()` truncates; codes are clean integers so this is exact.
    idx = codes_ref[...].astype(jnp.int32)                       # (TB, 1, N)

    # One-hot over the 10 board classes, built once per blocked step.
    iota = lax.broadcasted_iota(jnp.int32, (tb, num_cls, n), 1)  # (TB, 10, N)
    onehot = (iota == idx).astype(jnp.float32)                   # (TB, 10, N)

    # Broadcast the tiny table once so the LHS stays resident, then one batched
    # MXU matmul: out[b, k, n] = sum_d table_t[k, d] * onehot[b, d, n].
    table_b = jnp.broadcast_to(table_t_ref[...][None],
                               (tb, emb_dim, num_cls))           # (TB, 14, 10)
    out_ref[...] = lax.dot_general(
        table_b, onehot,
        dimension_numbers=(((2,), (1,)), ((0,), (0,))),
        preferred_element_type=jnp.float32,
        precision=lax.Precision.HIGHEST)                         # (TB, 14, N)


def _choose_batch_block(b, n):
    """Batch rows per grid step, sized against v7x's smaller VMEM."""
    n_pad = ((n + 127) // 128) * 128
    # double-buffered per-row footprint: output (16 sublane-padded x N) + codes
    bytes_per_row = 2 * (16 * n_pad * 4 + n_pad * 4)
    tb = min(128, (12 << 20) // max(bytes_per_row, 1))
    if tb >= b:
        return b                      # single full block (block == full dim)
    return max(8, (tb // 8) * 8)      # 8-aligned sub-blocks; ragged tail is OK


def input_parser(x, board_table, extra_table):
    """Forward pass of InputParser.

    x:           (B, 2, H, W) float32 (board codes in ch 0, extra info in ch 1)
    board_table: (10, 14) float32
    extra_table: (20, 7)  float32
    Returns (global_input (B,14,H,W), local_input (B,5,7,7), extra_input (B,7,7)).
    """
    B, C, H, W = x.shape
    N = H * W
    TB = _choose_batch_block(B, N)

    # Channel-0 codes, flattened lane-dense.  (Tiny slice pass; the 14x larger
    # embedding writeback dominates HBM traffic.)
    board_codes = x[:, 0, :, :].reshape(B, 1, N)                 # (B, 1, N)
    btab_t = board_table.T                                       # (14, 10)

    board_out = pl.pallas_call(
        _board_embed_kernel,
        out_shape=jax.ShapeDtypeStruct((B, BOARD_EMB_DIM, N), jnp.float32),
        grid_spec=pltpu.PrefetchScalarGridSpec(
            num_scalar_prefetch=0,
            grid=(pl.cdiv(B, TB),),
            in_specs=[
                pl.BlockSpec((TB, 1, N), lambda i: (i, 0, 0)),
                pl.BlockSpec((BOARD_EMB_DIM, BOARD_EMB_NUM), lambda i: (0, 0)),
            ],
            out_specs=pl.BlockSpec((TB, BOARD_EMB_DIM, N), lambda i: (i, 0, 0)),
        ),
        # With >=2 batch blocks the two v7x TensorCores each take blocks.
        # (If profiling shows no core split, switch to pltpu.CORE_PARALLEL.)
        compiler_params=pltpu.CompilerParams(dimension_semantics=("parallel",)),
    )(board_codes, btab_t)

    # (B, 14, H*W) -> (B, 14, H, W): free row-major reshape, already NCHW.
    global_input = board_out.reshape(B, BOARD_EMB_DIM, H, W)

    # Local input: pure slicing / stacking glue — left to plain JAX/XLA.
    local_input = jnp.stack(
        [x[:, 1, 0:7, 7 * i:7 * (i + 1)] for i in range(5)], axis=1)  # (B,5,7,7)

    # Extra-info embedding: 7 tokens/batch — trivially small, done wrapper-side
    # (removing it from the kernel kills the 7-lane masked-store stream).
    extra_idx = x[:, 1, 0, 35:35 + EXTRA_TOKENS].astype(jnp.int32)    # (B, 7)
    extra_input = jnp.transpose(extra_table[extra_idx], (0, 2, 1))    # (B, 7, 7)

    return global_input, local_input, extra_input


if __name__ == "__main__":
    key = jax.random.PRNGKey(0)
    k_board, k_ch1, k_extra, k_tab1, k_tab2 = jax.random.split(key, 5)

    # Small shapes consistent with the forward pass: W >= 42 (5 nearby 7x7
    # windows + 7 extra-info codes in row 0), H >= 7.
    B, H, W = 2, 8, 42

    board_codes = jax.random.randint(k_board, (B, H, W), 0, BOARD_EMB_NUM)
    ch1 = jax.random.uniform(k_ch1, (B, H, W), dtype=jnp.float32) * 5.0
    extra_codes = jax.random.randint(k_extra, (B, EXTRA_TOKENS), 0, EXTRA_EMB_NUM)
    # embed the integer extra-info codes into channel 1, row 0, cols 35:42
    ch1 = ch1.at[:, 0, 35:42].set(extra_codes.astype(jnp.float32))
    x = jnp.stack([board_codes.astype(jnp.float32), ch1], axis=1)   # (B, 2, H, W)

    # Deterministic "parameters" (nn.Embedding default init ~ N(0, 1)).
    board_table = jax.random.normal(k_tab1, (BOARD_EMB_NUM, BOARD_EMB_DIM), jnp.float32)
    extra_table = jax.random.normal(k_tab2, (EXTRA_EMB_NUM, EXTRA_EMB_DIM), jnp.float32)

    global_input, local_input, extra_input = jax.jit(input_parser)(
        x, board_table, extra_table)
    jax.block_until_ready((global_input, local_input, extra_input))

    # Pure-JAX reference check of the forward semantics.
    ref_global = jnp.transpose(board_table[board_codes], (0, 3, 1, 2))       # (B,14,H,W)
    ref_local = jnp.stack([x[:, 1, 0:7, 7 * i:7 * (i + 1)] for i in range(5)], axis=1)
    ref_extra = jnp.transpose(extra_table[extra_codes], (0, 2, 1))           # (B,7,7)

    assert global_input.shape == (B, BOARD_EMB_DIM, H, W)
    assert local_input.shape == (B, 5, 7, 7)
    assert extra_input.shape == (B, EXTRA_EMB_DIM, EXTRA_TOKENS)
    assert jnp.allclose(global_input, ref_global, atol=1e-5)
    assert jnp.allclose(local_input, ref_local, atol=1e-5)
    assert jnp.allclose(extra_input, ref_extra, atol=1e-5)

    print("KERNEL_OK")
</pallas_src>

<mosaic_0001>
module attributes {stable_mosaic.version = 11 : i64} {
  func.func @_board_embed_kernel(%arg0: i32, %arg1: memref<2x1x336xf32, #tpu.memory_space<vmem>>, %arg2: memref<14x10xf32, #tpu.memory_space<vmem>>, %arg3: memref<2x14x336xf32, #tpu.memory_space<vmem>>) attributes {dimension_semantics = [#tpu.dimension_semantics<parallel>], iteration_bounds = array<i64: 1>, scalar_prefetch = 0 : i64, scratch_operands = 0 : i64, tpu.core_type = #tpu.core_type<tc>, window_params = [{transform_indices = @transform_0, window_bounds = array<i64: 2, 1, 336>}, {pipeline_mode = #tpu.pipeline_mode<synchronous>, transform_indices = @transform_1, window_bounds = array<i64: 14, 10>}, {transform_indices = @transform_2, window_bounds = array<i64: 2, 14, 336>}]} {
    %c0 = arith.constant 0 : index
    %c0_0 = arith.constant 0 : index
    %c0_1 = arith.constant 0 : index
    %0 = vector.load %arg1[%c0, %c0_0, %c0_1] : memref<2x1x336xf32, #tpu.memory_space<vmem>>, vector<2x1x336xf32>
    %1 = arith.fptosi %0 : vector<2x1x336xf32> to vector<2x1x336xi32>
    %2 = tpu.iota {dimensions = array<i32: 1>} : vector<2x10x336xi32>
    %3 = vector.broadcast %1 : vector<2x1x336xi32> to vector<2x10x336xi32>
    %4 = arith.cmpi eq, %2, %3 : vector<2x10x336xi32>
    %5 = arith.extui %4 : vector<2x10x336xi1> to vector<2x10x336xi32>
    %6 = arith.sitofp %5 : vector<2x10x336xi32> to vector<2x10x336xf32>
    %c0_2 = arith.constant 0 : index
    %c0_3 = arith.constant 0 : index
    %7 = vector.load %arg2[%c0_2, %c0_3] : memref<14x10xf32, #tpu.memory_space<vmem>>, vector<14x10xf32>
    %8 = vector.shape_cast %7 : vector<14x10xf32> to vector<1x14x10xf32>
    %9 = vector.shape_cast %8 : vector<1x14x10xf32> to vector<1x14x10xf32>
    %10 = vector.broadcast %9 : vector<1x14x10xf32> to vector<2x14x10xf32>
    %cst = arith.constant dense<0.000000e+00> : vector<2x14x336xf32>
    %11 = tpu.matmul %10, %6, %cst {dimension_numbers = #tpu.dot_dimension_numbers<[2], [1], [1], [2], [0, 0, 0, 1, 1, 2], [0], [0]>, precision = #tpu.contract_precision<fp32>} : vector<2x14x10xf32>, vector<2x10x336xf32>, vector<2x14x336xf32> -> vector<2x14x336xf32>
    %c0_4 = arith.constant 0 : index
    %c0_5 = arith.constant 0 : index
    %c0_6 = arith.constant 0 : index
    %12 = vector.load %arg3[%c0_4, %c0_5, %c0_6] : memref<2x14x336xf32, #tpu.memory_space<vmem>>, vector<2x14x336xf32>
    tpu.vector_store %arg3[%c0_4, %c0_5, %c0_6], %11 {strides = array<i32>} : memref<2x14x336xf32, #tpu.memory_space<vmem>>, vector<2x14x336xf32>,
    return
  }
  func.func @transform_0(%arg0: i32) -> (i32, i32, i32) {
    %c0_i32 = arith.constant 0 : i32
    %c0_i32_0 = arith.constant 0 : i32
    %c0_i32_1 = arith.constant 0 : i32
    return %arg0, %c0_i32, %c0_i32_0 : i32, i32, i32
  }
  func.func @transform_1(%arg0: i32) -> (i32, i32) {
    %c0_i32 = arith.constant 0 : i32
    %c0_i32_0 = arith.constant 0 : i32
    %c0_i32_1 = arith.constant 0 : i32
    return %c0_i32, %c0_i32_0 : i32, i32
  }
  func.func @transform_2(%arg0: i32) -> (i32, i32, i32) {
    %c0_i32 = arith.constant 0 : i32
    %c0_i32_0 = arith.constant 0 : i32
    %c0_i32_1 = arith.constant 0 : i32
    return %arg0, %c0_i32, %c0_i32_0 : i32, i32, i32
  }
}

</mosaic_0001>

<llo_original>
// kernel: squeeze.2
$region0: #{squeeze.2}
  %s0 = inlined_call_operand.vmem [shape: f32[2,1,8,42], index: 0, kind: input, shape index: {}]
  %s1 = inlined_call_operand.vmem [shape: f32[2,1,336], index: 1, kind: output, shape index: {}]
  $region1: #{squeeze.2} parent=0
    #allocation0 [shape = 'u8[24576]{0}', space=vmem, size = 0x6000, scoped, tag = 'scoped mem for output reshape']
    %s2 = smov 3
    %v3 = vld [vmem:[%s0] ss:$8 sm:%s2]
    %vm4 = vcmask 343040
    %5 = vst.msk [vmem:[#allocation0] ss:$24 sm:$0x3] %vm4, %v3
    %s6 = scalar_lea.vmem %s0, 11
    %s7 = smov 3
    %v8 = vld [vmem:[%s6] ss:$-8 sm:%s7]
    %s9 = scalar_lea.vmem %s0, 3
    %s10 = smov 3
    %v11 = vld [vmem:[%s9] ss:$8 sm:%s10]
    %vm12 = vcmask 15360
    %v13 = vsel %vm12, %v11, %v8
    %14 = vrot.lane.b32.xlu0 %v13, 126
    %v15 = vpop.permute.xlu0 %14
    %vm16 = vcmask 326656
    %s17 = scalar_lea.vmem [#allocation0], 32
    %18 = vst.msk [vmem:[%s17] ss:$-24 sm:$0x3] %vm16, %v15
    %vm19 = vcmask 1048560
    %20 = vst.msk [vmem:[#allocation0] ss:$24 sm:$0x3] %vm19, %v15
    %s21 = scalar_lea.vmem %s0, 14
    %s22 = smov 3
    %v23 = vld [vmem:[%s21] ss:$-8 sm:%s22]
    %s24 = scalar_lea.vmem %s0, 14
    %s25 = smov 3
    %v26 = vld [vmem:[%s24] ss:$-8 sm:%s25]
    %vm27 = vcmask 31744
    %v28 = vsel %vm27, %v26, %v23
    %29 = vrot.lane.b32.xlu0 %v28, 124
    %v30 = vpop.permute.xlu0 %29
    %vm31 = vcmask 310272
    %s32 = scalar_lea.vmem [#allocation0], 40
    %33 = vst.msk [vmem:[%s32] ss:$-24 sm:$0x3] %vm31, %v30
    %vm34 = vcmask 1048544
    %s35 = scalar_lea.vmem [#allocation0], 32
    %36 = vst.msk [vmem:[%s35] ss:$-24 sm:$0x3] %vm34, %v30
    %s37 = scalar_lea.vmem %s0, 2
    %s38 = smov 3
    %v39 = vld [vmem:[%s37] ss:$8 sm:%s38]
    %40 = vrot.lane.b32.xlu0 %v39, 84
    %v41 = vpop.permute.xlu0 %40
    %vm42 = vcmask 1031840
    %43 = vst.msk [vmem:[#allocation0] ss:$24 sm:$0x3] %vm42, %v41
    %s44 = scalar_lea.vmem %s0, 13
    %s45 = smov 3
    %v46 = vld [vmem:[%s44] ss:$-8 sm:%s45]
    %47 = vrot.lane.b32.xlu0 %v46, 82
    %v48 = vpop.permute.xlu0 %47
    %vm49 = vcmask 1015440
    %s50 = scalar_lea.vmem [#allocation0], 32
    %51 = vst.msk [vmem:[%s50] ss:$-24 sm:$0x3] %vm49, %v48
    %s52 = scalar_lea.vmem %s0, 1
    %s53 = smov 3
    %v54 = vld [vmem:[%s52] ss:$8 sm:%s53]
    %55 = vrot.lane.b32.xlu0 %v54, 42
    %v56 = vpop.permute.xlu0 %55
    %vm57 = vcmask 687440
    %58 = vst.msk [vmem:[#allocation0] ss:$24 sm:$0x3] %vm57, %v56
    %s59 = scalar_lea.vmem %s0, 12
    %s60 = smov 3
    %v61 = vld [vmem:[%s59] ss:$-8 sm:%s60]
    %62 = vrot.lane.b32.xlu0 %v61, 40
    %v63 = vpop.permute.xlu0 %62
    %vm64 = vcmask 671040
    %s65 = scalar_lea.vmem [#allocation0], 32
    %66 = vst.msk [vmem:[%s65] ss:$-24 sm:$0x3] %vm64, %v63
    %s67 = scalar_lea.vmem %s0, 15
    %s68 = smov 3
    %v69 = vld [vmem:[%s67] ss:$-8 sm:%s68]
    %70 = vrot.lane.b32.xlu0 %v69, 38
    %v71 = vpop.permute.xlu0 %70
    %vm72 = vcmask 654640
    %s73 = scalar_lea.vmem [#allocation0], 40
    %74 = vst.msk [vmem:[%s73] ss:$-24 sm:$0x3] %vm72, %v71
    %s76 = sshll.u32 1, 1
    %s77 = ssub.s32 %s76, 1
    %v79 = vld [vmem:[#allocation0] sm:%s77]
    %s80 = sshll.u32 1, 1
    %s81 = ssub.s32 %s80, 1
    %82 = vst [vmem:[%s1] sm:%s81] %v79
    %s83 = scalar_lea.vmem [#allocation0], 8
    %v84 = vld [vmem:[%s83] sm:%s77]
    %s85 = sshll.u32 1, 1
    %s86 = ssub.s32 %s85, 1
    %s87 = scalar_lea.vmem %s1, 1
    %88 = vst [vmem:[%s87] sm:%s86] %v84
    %s89 = scalar_lea.vmem [#allocation0], 16
    %v90 = vld [vmem:[%s89] sm:%s77]
    %s91 = sshll.u32 1, 1
    %s92 = ssub.s32 %s91, 1
    %s93 = smul.addr 1, 2
    %s94 = scalar_lea.vmem %s1, %s93
    %95 = vst [vmem:[%s94] sm:%s92] %v90
    %s96 = scalar_lea.vmem [#allocation0], 24
    %v97 = vld [vmem:[%s96] sm:%s77]
    %s98 = sshll.u32 1, 1
    %s99 = ssub.s32 %s98, 1
    %s100 = smul.addr 1, 3
    %s101 = scalar_lea.vmem %s1, %s100
    %102 = vst [vmem:[%s101] sm:%s99] %v97
    %s103 = scalar_lea.vmem [#allocation0], 32
    %v104 = vld [vmem:[%s103] sm:%s77]
    %s105 = sshll.u32 1, 1
    %s106 = ssub.s32 %s105, 1
    %s107 = smul.addr 1, 4
    %s108 = scalar_lea.vmem %s1, %s107
    %109 = vst [vmem:[%s108] sm:%s106] %v104
    %s110 = scalar_lea.vmem [#allocation0], 40
    %v111 = vld [vmem:[%s110] sm:%s77]
    %s112 = sshll.u32 1, 1
    %s113 = ssub.s32 %s112, 1
    %s114 = smul.addr 1, 5
    %s115 = scalar_lea.vmem %s1, %s114
    %116 = vst [vmem:[%s115] sm:%s113] %v111

// kernel: input_parser.1
$region0: #{input_parser.1}
  #allocation0 [shape = 'u32[]', space=smem, size = 0x4, offset = 0x4, fixed_abs, tag = 'smem constant byte address 0x4 - core index']
  #allocation1 [shape = 'u32[144,128]{1,0:T(1,128)}', space=vmem, size = 0x12000, scoped, tag = 'internal scratch']
  %s0 = inlined_call_operand.vmem [shape: f32[2,1,336], index: 0, kind: input, shape index: {}]
  %s1 = inlined_call_operand.vmem [shape: f32[14,10], index: 1, kind: input, shape index: {}]
  %s2 = inlined_call_operand.vmem [shape: f32[2,14,336], index: 2, kind: output, shape index: {}]
  %s3 = sld [smem:[#allocation0]]
  $region18: #{input_parser.1} parent=0
    _
  %s5 = ssub.s32 1, %s3
  %s6 = scalar_select 0, %s5, %s3
  // Predicated region
  $region2: #{input_parser.1} parent=0 // pred_check
    _
  $region3: #{input_parser.1} parent=0 // pred_check_branch
    %8 = sbr.rel (0) target = $region5
  $region4: #{input_parser.1} parent=0 // pred_region
    _
  $region5: #{input_parser.1} parent=0 // pred_fallthru
    _
  // Predicated region
  $region6: #{input_parser.1} parent=0 // pred_check
    _
  $region7: #{input_parser.1} parent=0 // pred_check_branch
    %10 = sbr.rel (0) target = $region9
  $region8: #{input_parser.1} parent=0 // pred_region
    _
  $region9: #{input_parser.1} parent=0 // pred_fallthru
    _
  %v11 = vld [vmem:[%s0] sm:$0x7]
  %v12 = vld [vmem:[%s0 + $0x3] sm:$0x7]
  %v13 = vcvt.f32.s32.to.zero.pseudo %v11
  %v14 = vcvt.f32.s32.to.zero.pseudo %v12
  %v15 = vlaneseq
  %v16 = vshrl.u32 %v15, 7
  %v17 = vadd.s32 %v16, 8
  %v18 = vlaneseq
  %v19 = vshrl.u32 %v18, 7
  %v20 = vsub.s32 0, %v19
  %v21 = vrot.slane %v13, %v20
  %v22 = vlaneseq
  %v23 = vshrl.u32 %v22, 7
  %v24 = vsub.s32 1, %v23
  %v25 = vrot.slane %v13, %v24
  %v26 = vlaneseq
  %v27 = vshrl.u32 %v26, 7
  %v28 = vsub.s32 2, %v27
  %v29 = vrot.slane %v13, %v28
  %v30 = vlaneseq
  %v31 = vshrl.u32 %v30, 7
  %v32 = vsub.s32 0, %v31
  %v33 = vrot.slane %v14, %v32
  %v34 = vlaneseq
  %v35 = vshrl.u32 %v34, 7
  %v36 = vsub.s32 1, %v35
  %v37 = vrot.slane %v14, %v36
  %v38 = vlaneseq
  %v39 = vshrl.u32 %v38, 7
  %v40 = vsub.s32 2, %v39
  %v41 = vrot.slane %v14, %v40
  %vm42 = vcmp.eq.s32.totalorder %v16, %v21
  %vm43 = vcmp.eq.s32.totalorder %v16, %v25
  %vm44 = vcmp.eq.s32.totalorder %v16, %v29
  %vm45 = vcmp.eq.s32.totalorder %v17, %v21
  %vm46 = vcmp.eq.s32.totalorder %v17, %v25
  %vm47 = vcmp.eq.s32.totalorder %v17, %v29
  %vm48 = vcmp.eq.s32.totalorder %v16, %v33
  %vm49 = vcmp.eq.s32.totalorder %v16, %v37
  %vm50 = vcmp.eq.s32.totalorder %v16, %v41
  %vm51 = vcmp.eq.s32.totalorder %v17, %v33
  %vm52 = vcmp.eq.s32.totalorder %v17, %v37
  %vm53 = vcmp.eq.s32.totalorder %v17, %v41
  %v54 = vsel %vm42, 1, 0
  %v55 = vsel %vm43, 1, 0
  %v56 = vsel %vm44, 1, 0
  %v57 = vsel %vm45, 1, 0
  %v58 = vsel %vm46, 1, 0
  %v59 = vsel %vm47, 1, 0
  %v60 = vsel %vm48, 1, 0
  %v61 = vsel %vm49, 1, 0
  %v62 = vsel %vm50, 1, 0
  %v63 = vsel %vm51, 1, 0
  %v64 = vsel %vm52, 1, 0
  %v65 = vsel %vm53, 1, 0
  %v66 = vcvt.s32.f32 %v54
  %v67 = vcvt.s32.f32 %v55
  %v68 = vcvt.s32.f32 %v56
  %v69 = vcvt.s32.f32 %v57
  %v70 = vcvt.s32.f32 %v58
  %v71 = vcvt.s32.f32 %v59
  %v72 = vcvt.s32.f32 %v60
  %v73 = vcvt.s32.f32 %v61
  %v74 = vcvt.s32.f32 %v62
  %v75 = vcvt.s32.f32 %v63
  %v76 = vcvt.s32.f32 %v64
  %v77 = vcvt.s32.f32 %v65
  %v78 = vld [vmem:[%s1] sm:$0xff]
  %v79 = vld [vmem:[%s1 + $0x8] sm:$0x3f]
  %vm80 = vcmask 80896
  %v82 = vsel %vm80, %v78, 0
  %v85 = vsel %vm80, %v79, 0
  %vm87 = vcmask 1041408
  %v89 = vsel %vm87, %v69, 0
  %v92 = vsel %vm87, %v70, 0
  %v95 = vsel %vm87, %v71, 0
  %97 = vmatprep.subr.mxu0 0.0
  %98 = vmatpush1.msra.mxu0 0.0
  %99 = vmatprep.subr.mxu0 0.0
  %100 = vmatpush1.msra.mxu0 0.0
  %101 = vmatprep.subr.mxu0 0.0
  %102 = vmatpush1.msra.mxu0 0.0
  %103 = vmatprep.subr.mxu0 0.0
  %104 = vmatpush1.msra.mxu0 0.0
  %105 = vmatprep.subr.mxu0 0.0
  %106 = vmatpush1.msra.mxu0 0.0
  %107 = vmatprep.subr.mxu0 0.0
  %108 = vmatpush1.msra.mxu0 0.0
  %109 = vmatprep.subr.mxu0 0.0
  %110 = vmatpush1.msra.mxu0 0.0
  %111 = vmatprep.subr.mxu0 0.0
  %112 = vmatpush1.msra.mxu0 0.0
  %113 = vmatprep.subr.mxu0 0.0
  %114 = vmatpush1.msra.mxu0 0.0
  %115 = vmatprep.subr.mxu0 0.0
  %116 = vmatpush1.msra.mxu0 0.0
  %117 = vmatprep.subr.mxu0 0.0
  %118 = vmatpush1.msra.mxu0 0.0
  %119 = vmatprep.subr.mxu0 0.0
  %120 = vmatpush1.msra.mxu0 0.0
  %121 = vmatprep.subr.mxu0 0.0
  %122 = vmatpush1.msra.mxu0 0.0
  %123 = vmatprep.subr.mxu0 0.0
  %124 = vmatpush1.msra.mxu0 0.0
  %v125 = vand.u32 %v92, 4294901760
  %126 = vmatprep.subr.mxu0 %v125
  %v127 = vand.u32 %v89, 4294901760
  %128 = vmatpush1.msra.mxu0 %v127
  %v129 = vand.u32 %v67, 4294901760
  %130 = vmatprep.subr.mxu0 %v129
  %v131 = vand.u32 %v66, 4294901760
  %132 = vmatpush1.msra.mxu0 %v131
  %133 = vmatprep.subr.mxu0 0.0
  %134 = vmatpush2.msra.mxu0 0.0
  %135 = vmatprep.subr.mxu0 0.0
  %136 = vmatpush2.msra.mxu0 0.0
  %137 = vmatprep.subr.mxu0 0.0
  %138 = vmatpush2.msra.mxu0 0.0
  %139 = vmatprep.subr.mxu0 0.0
  %140 = vmatpush2.msra.mxu0 0.0
  %141 = vmatprep.subr.mxu0 0.0
  %142 = vmatpush2.msra.mxu0 0.0
  %143 = vmatprep.subr.mxu0 0.0
  %144 = vmatpush2.msra.mxu0 0.0
  %145 = vmatprep.subr.mxu0 0.0
  %146 = vmatpush2.msra.mxu0 0.0
  %147 = vmatprep.subr.mxu0 0.0
  %148 = vmatpush2.msra.mxu0 0.0
  %149 = vmatprep.subr.mxu0 0.0
  %150 = vmatpush2.msra.mxu0 0.0
  %151 = vmatprep.subr.mxu0 0.0
  %152 = vmatpush2.msra.mxu0 0.0
  %153 = vmatprep.subr.mxu0 0.0
  %154 = vmatpush2.msra.mxu0 0.0
  %155 = vmatprep.subr.mxu0 0.0
  %156 = vmatpush2.msra.mxu0 0.0
  %157 = vmatprep.subr.mxu0 0.0
  %158 = vmatpush2.msra.mxu0 0.0
  %159 = vmatprep.subr.mxu0 0.0
  %160 = vmatpush2.msra.mxu0 0.0
  %161 = vmatprep.subr.mxu0 0.0
  %162 = vmatpush2.msra.mxu0 0.0
  %163 = vmatprep.subr.mxu0 0.0
  %164 = vmatpush2.msra.mxu0 0.0
  %165 = vmatprep.mubr.f32.mxu0 0.0
  %v166 = vand.u32 %v82, 4294901760
  %v167 = vsub.f32 %v82, %v166
  %v168 = vand.u32 %v167, 4294901760
  %v169 = vsub.f32 %v167, %v168
  %v170 = vand.u32 %v169, 4294901760
  %171 = vmatmul.mubr.f32.gmra.mxu0 %v170
  %v172 = vpop.f32.mrf.mxu0
  %v173 = vadd.f32 0.0, %v172
  %v174 = vpop.f32.mrf.mxu0
  %v175 = vadd.f32 0.0, %v174
  %176 = vmatprep.mubr.f32.mxu0 0.0
  %v177 = vand.u32 %v85, 4294901760
  %v178 = vsub.f32 %v85, %v177
  %v179 = vand.u32 %v178, 4294901760
  %v180 = vsub.f32 %v178, %v179
  %v181 = vand.u32 %v180, 4294901760
  %182 = vmatmul.mubr.f32.gmra.mxu0 %v181
  %v183 = vpop.f32.mrf.mxu0
  %v184 = vadd.f32 0.0, %v183
  %v185 = vpop.f32.mrf.mxu0
  %v186 = vadd.f32 0.0, %v185
  %187 = vdwg.mxu0
  %188 = vmatprep.subr.mxu0 0.0
  %189 = vmatpush1.msra.mxu0 0.0
  %190 = vmatprep.subr.mxu0 0.0
  %191 = vmatpush1.msra.mxu0 0.0
  %192 = vmatprep.subr.mxu0 0.0
  %193 = vmatpush1.msra.mxu0 0.0
  %194 = vmatprep.subr.mxu0 0.0
  %195 = vmatpush1.msra.mxu0 0.0
  %196 = vmatprep.subr.mxu0 0.0
  %197 = vmatpush1.msra.mxu0 0.0
  %198 = vmatprep.subr.mxu0 0.0
  %199 = vmatpush1.msra.mxu0 0.0
  %200 = vmatprep.subr.mxu0 0.0
  %201 = vmatpush1.msra.mxu0 0.0
  %202 = vmatprep.subr.mxu0 0.0
  %203 = vmatpush1.msra.mxu0 0.0
  %204 = vmatprep.subr.mxu0 0.0
  %205 = vmatpush1.msra.mxu0 0.0
  %206 = vmatprep.subr.mxu0 0.0
  %207 = vmatpush1.msra.mxu0 0.0
  %208 = vmatprep.subr.mxu0 0.0
  %209 = vmatpush1.msra.mxu0 0.0
  %210 = vmatprep.subr.mxu0 0.0
  %211 = vmatpush1.msra.mxu0 0.0
  %212 = vmatprep.subr.mxu0 0.0
  %213 = vmatpush1.msra.mxu0 0.0
  %214 = vmatprep.subr.mxu0 0.0
  %215 = vmatpush1.msra.mxu0 0.0
  %v216 = vand.u32 %v92, 4294901760
  %v217 = vsub.f32 %v92, %v216
  %v218 = vand.u32 %v217, 4294901760
  %v219 = vsub.f32 %v217, %v218
  %v220 = vand.u32 %v219, 4294901760
  %221 = vmatprep.subr.mxu0 %v220
  %v222 = vand.u32 %v89, 4294901760
  %v223 = vsub.f32 %v89, %v222
  %v224 = vand.u32 %v223, 4294901760
  %v225 = vsub.f32 %v223, %v224
  %v226 = vand.u32 %v225, 4294901760
  %227 = vmatpush1.msra.mxu0 %v226
  %v228 = vand.u32 %v67, 4294901760
  %v229 = vsub.f32 %v67, %v228
  %v230 = vand.u32 %v229, 4294901760
  %v231 = vsub.f32 %v229, %v230
  %v232 = vand.u32 %v231, 4294901760
  %233 = vmatprep.subr.mxu0 %v232
  %v234 = vand.u32 %v66, 4294901760
  %v235 = vsub.f32 %v66, %v234
  %v236 = vand.u32 %v235, 4294901760
  %v237 = vsub.f32 %v235, %v236
  %v238 = vand.u32 %v237, 4294901760
  %239 = vmatpush1.msra.mxu0 %v238
  %240 = vmatprep.subr.mxu0 0.0
  %241 = vmatpush2.msra.mxu0 0.0
  %242 = vmatprep.subr.mxu0 0.0
  %243 = vmatpush2.msra.mxu0 0.0
  %244 = vmatprep.subr.mxu0 0.0
  %245 = vmatpush2.msra.mxu0 0.0
  %246 = vmatprep.subr.mxu0 0.0
  %247 = vmatpush2.msra.mxu0 0.0
  %248 = vmatprep.subr.mxu0 0.0
  %249 = vmatpush2.msra.mxu0 0.0
  %250 = vmatprep.subr.mxu0 0.0
  %251 = vmatpush2.msra.mxu0 0.0
  %252 = vmatprep.subr.mxu0 0.0
  %253 = vmatpush2.msra.mxu0 0.0
  %254 = vmatprep.subr.mxu0 0.0
  %255 = vmatpush2.msra.mxu0 0.0
  %256 = vmatprep.subr.mxu0 0.0
  %257 = vmatpush2.msra.mxu0 0.0
  %258 = vmatprep.subr.mxu0 0.0
  %259 = vmatpush2.msra.mxu0 0.0
  %260 = vmatprep.subr.mxu0 0.0
  %261 = vmatpush2.msra.mxu0 0.0
  %262 = vmatprep.subr.mxu0 0.0
  %263 = vmatpush2.msra.mxu0 0.0
  %264 = vmatprep.subr.mxu0 0.0
  %265 = vmatpush2.msra.mxu0 0.0
  %266 = vmatprep.subr.mxu0 0.0
  %267 = vmatpush2.msra.mxu0 0.0
  %268 = vmatprep.subr.mxu0 0.0
  %269 = vmatpush2.msra.mxu0 0.0
  %270 = vmatprep.subr.mxu0 0.0
  %271 = vmatpush2.msra.mxu0 0.0
  %272 = vmatprep.mubr.f32.mxu0 0.0
  %v273 = vand.u32 %v82, 4294901760
  %274 = vmatmul.mubr.f32.gmra.mxu0 %v273
  %v275 = vpop.f32.mrf.mxu0
  %v276 = vadd.f32 %v173, %v275
  %v277 = vpop.f32.mrf.mxu0
  %v278 = vadd.f32 %v175, %v277
  %279 = vmatprep.mubr.f32.mxu0 0.0
  %v280 = vand.u32 %v85, 4294901760
  %281 = vmatmul.mubr.f32.gmra.mxu0 %v280
  %v282 = vpop.f32.mrf.mxu0
  %v283 = vadd.f32 %v184, %v282
  %v284 = vpop.f32.mrf.mxu0
  %v285 = vadd.f32 %v186, %v284
  %286 = vdwg.mxu0
  %287 = vmatprep.subr.mxu0 0.0
  %288 = vmatpush1.msra.mxu0 0.0
  %289 = vmatprep.subr.mxu0 0.0
  %290 = vmatpush1.msra.mxu0 0.0
  %291 = vmatprep.subr.mxu0 0.0
  %292 = vmatpush1.msra.mxu0 0.0
  %293 = vmatprep.subr.mxu0 0.0
  %294 = vmatpush1.msra.mxu0 0.0
  %295 = vmatprep.subr.mxu0 0.0
  %296 = vmatpush1.msra.mxu0 0.0
  %297 = vmatprep.subr.mxu0 0.0
  %298 = vmatpush1.msra.mxu0 0.0
  %299 = vmatprep.subr.mxu0 0.0
  %300 = vmatpush1.msra.mxu0 0.0
  %301 = vmatprep.subr.mxu0 0.0
  %302 = vmatpush1.msra.mxu0 0.0
  %303 = vmatprep.subr.mxu0 0.0
  %304 = vmatpush1.msra.mxu0 0.0
  %305 = vmatprep.subr.mxu0 0.0
  %306 = vmatpush1.msra.mxu0 0.0
  %307 = vmatprep.subr.mxu0 0.0
  %308 = vmatpush1.msra.mxu0 0.0
  %309 = vmatprep.subr.mxu0 0.0
  %310 = vmatpush1.msra.mxu0 0.0
  %311 = vmatprep.subr.mxu0 0.0
  %312 = vmatpush1.msra.mxu0 0.0
  %313 = vmatprep.subr.mxu0 0.0
  %314 = vmatpush1.msra.mxu0 0.0
  %v315 = vand.u32 %v92, 4294901760
  %v316 = vsub.f32 %v92, %v315
  %317 = vmatprep.subr.mxu0 %v316
  %v318 = vand.u32 %v89, 4294901760
  %v319 = vsub.f32 %v89, %v318
  %320 = vmatpush1.msra.mxu0 %v319
  %v321 = vand.u32 %v67, 4294901760
  %v322 = vsub.f32 %v67, %v321
  %323 = vmatprep.subr.mxu0 %v322
  %v324 = vand.u32 %v66, 4294901760
  %v325 = vsub.f32 %v66, %v324
  %326 = vmatpush1.msra.mxu0 %v325
  %327 = vmatprep.subr.mxu0 0.0
  %328 = vmatpush2.msra.mxu0 0.0
  %329 = vmatprep.subr.mxu0 0.0
  %330 = vmatpush2.msra.mxu0 0.0
  %331 = vmatprep.subr.mxu0 0.0
  %332 = vmatpush2.msra.mxu0 0.0
  %333 = vmatprep.subr.mxu0 0.0
  %334 = vmatpush2.msra.mxu0 0.0
  %335 = vmatprep.subr.mxu0 0.0
  %336 = vmatpush2.msra.mxu0 0.0
  %337 = vmatprep.subr.mxu0 0.0
  %338 = vmatpush2.msra.mxu0 0.0
  %339 = vmatprep.subr.mxu0 0.0
  %340 = vmatpush2.msra.mxu0 0.0
  %341 = vmatprep.subr.mxu0 0.0
  %342 = vmatpush2.msra.mxu0 0.0
  %343 = vmatprep.subr.mxu0 0.0
  %344 = vmatpush2.msra.mxu0 0.0
  %345 = vmatprep.subr.mxu0 0.0
  %346 = vmatpush2.msra.mxu0 0.0
  %347 = vmatprep.subr.mxu0 0.0
  %348 = vmatpush2.msra.mxu0 0.0
  %349 = vmatprep.subr.mxu0 0.0
  %350 = vmatpush2.msra.mxu0 0.0
  %351 = vmatprep.subr.mxu0 0.0
  %352 = vmatpush2.msra.mxu0 0.0
  %353 = vmatprep.subr.mxu0 0.0
  %354 = vmatpush2.msra.mxu0 0.0
  %355 = vmatprep.subr.mxu0 0.0
  %356 = vmatpush2.msra.mxu0 0.0
  %357 = vmatprep.subr.mxu0 0.0
  %358 = vmatpush2.msra.mxu0 0.0
  %359 = vmatprep.mubr.f32.mxu0 0.0
  %v360 = vand.u32 %v82, 4294901760
  %v361 = vsub.f32 %v82, %v360
  %362 = vmatmul.mubr.f32.gmra.mxu0 %v361
  %v363 = vpop.f32.mrf.mxu0
  %v364 = vadd.f32 %v276, %v363
  %v365 = vpop.f32.mrf.mxu0
  %v366 = vadd.f32 %v278, %v365
  %367 = vmatprep.mubr.f32.mxu0 0.0
  %v368 = vand.u32 %v85, 4294901760
  %v369 = vsub.f32 %v85, %v368
  %370 = vmatmul.mubr.f32.gmra.mxu0 %v369
  %v371 = vpop.f32.mrf.mxu0
  %v372 = vadd.f32 %v283, %v371
  %v373 = vpop.f32.mrf.mxu0
  %v374 = vadd.f32 %v285, %v373
  %375 = vdwg.mxu0
  %376 = vmatprep.subr.mxu0 0.0
  %377 = vmatpush1.msra.mxu0 0.0
  %378 = vmatprep.subr.mxu0 0.0
  %379 = vmatpush1.msra.mxu0 0.0
  %380 = vmatprep.subr.mxu0 0.0
  %381 = vmatpush1.msra.mxu0 0.0
  %382 = vmatprep.subr.mxu0 0.0
  %383 = vmatpush1.msra.mxu0 0.0
  %384 = vmatprep.subr.mxu0 0.0
  %385 = vmatpush1.msra.mxu0 0.0
  %386 = vmatprep.subr.mxu0 0.0
  %387 = vmatpush1.msra.mxu0 0.0
  %388 = vmatprep.subr.mxu0 0.0
  %389 = vmatpush1.msra.mxu0 0.0
  %390 = vmatprep.subr.mxu0 0.0
  %391 = vmatpush1.msra.mxu0 0.0
  %392 = vmatprep.subr.mxu0 0.0
  %393 = vmatpush1.msra.mxu0 0.0
  %394 = vmatprep.subr.mxu0 0.0
  %395 = vmatpush1.msra.mxu0 0.0
  %396 = vmatprep.subr.mxu0 0.0
  %397 = vmatpush1.msra.mxu0 0.0
  %398 = vmatprep.subr.mxu0 0.0
  %399 = vmatpush1.msra.mxu0 0.0
  %400 = vmatprep.subr.mxu0 0.0
  %401 = vmatpush1.msra.mxu0 0.0
  %402 = vmatprep.subr.mxu0 0.0
  %403 = vmatpush1.msra.mxu0 0.0
  %v404 = vand.u32 %v92, 4294901760
  %405 = vmatprep.subr.mxu0 %v404
  %v406 = vand.u32 %v89, 4294901760
  %407 = vmatpush1.msra.mxu0 %v406
  %v408 = vand.u32 %v67, 4294901760
  %409 = vmatprep.subr.mxu0 %v408
  %v410 = vand.u32 %v66, 4294901760
  %411 = vmatpush1.msra.mxu0 %v410
  %412 = vmatprep.subr.mxu0 0.0
  %413 = vmatpush2.msra.mxu0 0.0
  %414 = vmatprep.subr.mxu0 0.0
  %415 = vmatpush2.msra.mxu0 0.0
  %416 = vmatprep.subr.mxu0 0.0
  %417 = vmatpush2.msra.mxu0 0.0
  %418 = vmatprep.subr.mxu0 0.0
  %419 = vmatpush2.msra.mxu0 0.0
  %420 = vmatprep.subr.mxu0 0.0
  %421 = vmatpush2.msra.mxu0 0.0
  %422 = vmatprep.subr.mxu0 0.0
  %423 = vmatpush2.msra.mxu0 0.0
  %424 = vmatprep.subr.mxu0 0.0
  %425 = vmatpush2.msra.mxu0 0.0
  %426 = vmatprep.subr.mxu0 0.0
  %427 = vmatpush2.msra.mxu0 0.0
  %428 = vmatprep.subr.mxu0 0.0
  %429 = vmatpush2.msra.mxu0 0.0
  %430 = vmatprep.subr.mxu0 0.0
  %431 = vmatpush2.msra.mxu0 0.0
  %432 = vmatprep.subr.mxu0 0.0
  %433 = vmatpush2.msra.mxu0 0.0
  %434 = vmatprep.subr.mxu0 0.0
  %435 = vmatpush2.msra.mxu0 0.0
  %436 = vmatprep.subr.mxu0 0.0
  %437 = vmatpush2.msra.mxu0 0.0
  %438 = vmatprep.subr.mxu0 0.0
  %439 = vmatpush2.msra.mxu0 0.0
  %440 = vmatprep.subr.mxu0 0.0
  %441 = vmatpush2.msra.mxu0 0.0
  %442 = vmatprep.subr.mxu0 0.0
  %443 = vmatpush2.msra.mxu0 0.0
  %444 = vmatprep.mubr.f32.mxu0 0.0
  %v445 = vand.u32 %v82, 4294901760
  %v446 = vsub.f32 %v82, %v445
  %v447 = vand.u32 %v446, 4294901760
  %448 = vmatmul.mubr.f32.gmra.mxu0 %v447
  %v449 = vpop.f32.mrf.mxu0
  %v450 = vadd.f32 %v364, %v449
  %v451 = vpop.f32.mrf.mxu0
  %v452 = vadd.f32 %v366, %v451
  %453 = vmatprep.mubr.f32.mxu0 0.0
  %v454 = vand.u32 %v85, 4294901760
  %v455 = vsub.f32 %v85, %v454
  %v456 = vand.u32 %v455, 4294901760
  %457 = vmatmul.mubr.f32.gmra.mxu0 %v456
  %v458 = vpop.f32.mrf.mxu0
  %v459 = vadd.f32 %v372, %v458
  %v460 = vpop.f32.mrf.mxu0
  %v461 = vadd.f32 %v374, %v460
  %462 = vdwg.mxu0
  %463 = vmatprep.subr.mxu0 0.0
  %464 = vmatpush1.msra.mxu0 0.0
  %465 = vmatprep.subr.mxu0 0.0
  %466 = vmatpush1.msra.mxu0 0.0
  %467 = vmatprep.subr.mxu0 0.0
  %468 = vmatpush1.msra.mxu0 0.0
  %469 = vmatprep.subr.mxu0 0.0
  %470 = vmatpush1.msra.mxu0 0.0
  %471 = vmatprep.subr.mxu0 0.0
  %472 = vmatpush1.msra.mxu0 0.0
  %473 = vmatprep.subr.mxu0 0.0
  %474 = vmatpush1.msra.mxu0 0.0
  %475 = vmatprep.subr.mxu0 0.0
  %476 = vmatpush1.msra.mxu0 0.0
  %477 = vmatprep.subr.mxu0 0.0
  %478 = vmatpush1.msra.mxu0 0.0
  %479 = vmatprep.subr.mxu0 0.0
  %480 = vmatpush1.msra.mxu0 0.0
  %481 = vmatprep.subr.mxu0 0.0
  %482 = vmatpush1.msra.mxu0 0.0
  %483 = vmatprep.subr.mxu0 0.0
  %484 = vmatpush1.msra.mxu0 0.0
  %485 = vmatprep.subr.mxu0 0.0
  %486 = vmatpush1.msra.mxu0 0.0
  %487 = vmatprep.subr.mxu0 0.0
  %488 = vmatpush1.msra.mxu0 0.0
  %489 = vmatprep.subr.mxu0 0.0
  %490 = vmatpush1.msra.mxu0 0.0
  %v491 = vand.u32 %v92, 4294901760
  %v492 = vsub.f32 %v92, %v491
  %v493 = vand.u32 %v492, 4294901760
  %494 = vmatprep.subr.mxu0 %v493
  %v495 = vand.u32 %v89, 4294901760
  %v496 = vsub.f32 %v89, %v495
  %v497 = vand.u32 %v496, 4294901760
  %498 = vmatpush1.msra.mxu0 %v497
  %v499 = vand.u32 %v67, 4294901760
  %v500 = vsub.f32 %v67, %v499
  %v501 = vand.u32 %v500, 4294901760
  %502 = vmatprep.subr.mxu0 %v501
  %v503 = vand.u32 %v66, 4294901760
  %v504 = vsub.f32 %v66, %v503
  %v505 = vand.u32 %v504, 4294901760
  %506 = vmatpush1.msra.mxu0 %v505
  %507 = vmatprep.subr.mxu0 0.0
  %508 = vmatpush2.msra.mxu0 0.0
  %509 = vmatprep.subr.mxu0 0.0
  %510 = vmatpush2.msra.mxu0 0.0
  %511 = vmatprep.subr.mxu0 0.0
  %512 = vmatpush2.msra.mxu0 0.0
  %513 = vmatprep.subr.mxu0 0.0
  %514 = vmatpush2.msra.mxu0 0.0
  %515 = vmatprep.subr.mxu0 0.0
  %516 = vmatpush2.msra.mxu0 0.0
  %517 = vmatprep.subr.mxu0 0.0
  %518 = vmatpush2.msra.mxu0 0.0
  %519 = vmatprep.subr.mxu0 0.0
  %520 = vmatpush2.msra.mxu0 0.0
  %521 = vmatprep.subr.mxu0 0.0
  %522 = vmatpush2.msra.mxu0 0.0
  %523 = vmatprep.subr.mxu0 0.0
  %524 = vmatpush2.msra.mxu0 0.0
  %525 = vmatprep.subr.mxu0 0.0
  %526 = vmatpush2.msra.mxu0 0.0
  %527 = vmatprep.subr.mxu0 0.0
  %528 = vmatpush2.msra.mxu0 0.0
  %529 = vmatprep.subr.mxu0 0.0
  %530 = vmatpush2.msra.mxu0 0.0
  %531 = vmatprep.subr.mxu0 0.0
  %532 = vmatpush2.msra.mxu0 0.0
  %533 = vmatprep.subr.mxu0 0.0
  %534 = vmatpush2.msra.mxu0 0.0
  %535 = vmatprep.subr.mxu0 0.0
  %536 = vmatpush2.msra.mxu0 0.0
  %537 = vmatprep.subr.mxu0 0.0
  %538 = vmatpush2.msra.mxu0 0.0
  %539 = vmatprep.mubr.f32.mxu0 0.0
  %v540 = vand.u32 %v82, 4294901760
  %541 = vmatmul.mubr.f32.gmra.mxu0 %v540
  %v542 = vpop.f32.mrf.mxu0
  %v543 = vadd.f32 %v450, %v542
  %v544 = vpop.f32.mrf.mxu0
  %v545 = vadd.f32 %v452, %v544
  %546 = vmatprep.mubr.f32.mxu0 0.0
  %v547 = vand.u32 %v85, 4294901760
  %548 = vmatmul.mubr.f32.gmra.mxu0 %v547
  %v549 = vpop.f32.mrf.mxu0
  %v550 = vadd.f32 %v459, %v549
  %v551 = vpop.f32.mrf.mxu0
  %v552 = vadd.f32 %v461, %v551
  %553 = vdwg.mxu0
  %554 = vmatprep.subr.mxu0 0.0
  %555 = vmatpush1.msra.mxu0 0.0
  %556 = vmatprep.subr.mxu0 0.0
  %557 = vmatpush1.msra.mxu0 0.0
  %558 = vmatprep.subr.mxu0 0.0
  %559 = vmatpush1.msra.mxu0 0.0
  %560 = vmatprep.subr.mxu0 0.0
  %561 = vmatpush1.msra.mxu0 0.0
  %562 = vmatprep.subr.mxu0 0.0
  %563 = vmatpush1.msra.mxu0 0.0
  %564 = vmatprep.subr.mxu0 0.0
  %565 = vmatpush1.msra.mxu0 0.0
  %566 = vmatprep.subr.mxu0 0.0
  %567 = vmatpush1.msra.mxu0 0.0
  %568 = vmatprep.subr.mxu0 0.0
  %569 = vmatpush1.msra.mxu0 0.0
  %570 = vmatprep.subr.mxu0 0.0
  %571 = vmatpush1.msra.mxu0 0.0
  %572 = vmatprep.subr.mxu0 0.0
  %573 = vmatpush1.msra.mxu0 0.0
  %574 = vmatprep.subr.mxu0 0.0
  %575 = vmatpush1.msra.mxu0 0.0
  %576 = vmatprep.subr.mxu0 0.0
  %577 = vmatpush1.msra.mxu0 0.0
  %578 = vmatprep.subr.mxu0 0.0
  %579 = vmatpush1.msra.mxu0 0.0
  %580 = vmatprep.subr.mxu0 0.0
  %581 = vmatpush1.msra.mxu0 0.0
  %v582 = vand.u32 %v92, 4294901760
  %583 = vmatprep.subr.mxu0 %v582
  %v584 = vand.u32 %v89, 4294901760
  %585 = vmatpush1.msra.mxu0 %v584
  %v586 = vand.u32 %v67, 4294901760
  %587 = vmatprep.subr.mxu0 %v586
  %v588 = vand.u32 %v66, 4294901760
  %589 = vmatpush1.msra.mxu0 %v588
  %590 = vmatprep.subr.mxu0 0.0
  %591 = vmatpush2.msra.mxu0 0.0
  %592 = vmatprep.subr.mxu0 0.0
  %593 = vmatpush2.msra.mxu0 0.0
  %594 = vmatprep.subr.mxu0 0.0
  %595 = vmatpush2.msra.mxu0 0.0
  %596 = vmatprep.subr.mxu0 0.0
  %597 = vmatpush2.msra.mxu0 0.0
  %598 = vmatprep.subr.mxu0 0.0
  %599 = vmatpush2.msra.mxu0 0.0
  %600 = vmatprep.subr.mxu0 0.0
  %601 = vmatpush2.msra.mxu0 0.0
  %602 = vmatprep.subr.mxu0 0.0
  %603 = vmatpush2.msra.mxu0 0.0
  %604 = vmatprep.subr.mxu0 0.0
  %605 = vmatpush2.msra.mxu0 0.0
  %606 = vmatprep.subr.mxu0 0.0
  %607 = vmatpush2.msra.mxu0 0.0
  %608 = vmatprep.subr.mxu0 0.0
  %609 = vmatpush2.msra.mxu0 0.0
  %610 = vmatprep.subr.mxu0 0.0
  %611 = vmatpush2.msra.mxu0 0.0
  %612 = vmatprep.subr.mxu0 0.0
  %613 = vmatpush2.msra.mxu0 0.0
  %614 = vmatprep.subr.mxu0 0.0
  %615 = vmatpush2.msra.mxu0 0.0
  %616 = vmatprep.subr.mxu0 0.0
  %617 = vmatpush2.msra.mxu0 0.0
  %618 = vmatprep.subr.mxu0 0.0
  %619 = vmatpush2.msra.mxu0 0.0
  %620 = vmatprep.subr.mxu0 0.0
  %621 = vmatpush2.msra.mxu0 0.0
  %622 = vmatprep.mubr.f32.mxu0 0.0
  %v623 = vand.u32 %v82, 4294901760
  %624 = vmatmul.mubr.f32.gmra.mxu0 %v623
  %v625 = vpop.f32.mrf.mxu0
  %v626 = vadd.f32 %v543, %v625
  %v627 = vpop.f32.mrf.mxu0
  %v628 = vadd.f32 %v545, %v627
  %629 = vmatprep.mubr.f32.mxu0 0.0
  %v630 = vand.u32 %v85, 4294901760
  %631 = vmatmul.mubr.f32.gmra.mxu0 %v630
  %v632 = vpop.f32.mrf.mxu0
  %v633 = vadd.f32 %v550, %v632
  %v634 = vpop.f32.mrf.mxu0
  %v635 = vadd.f32 %v552, %v634
  %636 = vdwg.mxu0
  %637 = vmatprep.subr.mxu0 0.0
  %638 = vmatpush1.msra.mxu0 0.0
  %639 = vmatprep.subr.mxu0 0.0
  %640 = vmatpush1.msra.mxu0 0.0
  %641 = vmatprep.subr.mxu0 0.0
  %642 = vmatpush1.msra.mxu0 0.0
  %643 = vmatprep.subr.mxu0 0.0
  %644 = vmatpush1.msra.mxu0 0.0
  %645 = vmatprep.subr.mxu0 0.0
  %646 = vmatpush1.msra.mxu0 0.0
  %647 = vmatprep.subr.mxu0 0.0
  %648 = vmatpush1.msra.mxu0 0.0
  %649 = vmatprep.subr.mxu0 0.0
  %650 = vmatpush1.msra.mxu0 0.0
  %651 = vmatprep.subr.mxu0 0.0
  %652 = vmatpush1.msra.mxu0 0.0
  %653 = vmatprep.subr.mxu0 0.0
  %654 = vmatpush1.msra.mxu0 0.0
  %655 = vmatprep.subr.mxu0 0.0
  %656 = vmatpush1.msra.mxu0 0.0
  %657 = vmatprep.subr.mxu0 0.0
  %658 = vmatpush1.msra.mxu0 0.0
  %659 = vmatprep.subr.mxu0 0.0
  %660 = vmatpush1.msra.mxu0 0.0
  %661 = vmatprep.subr.mxu0 0.0
  %662 = vmatpush1.msra.mxu0 0.0
  %663 = vmatprep.subr.mxu0 0.0
  %664 = vmatpush1.msra.mxu0 0.0
  %665 = vmatprep.subr.mxu0 0.0
  %v666 = vand.u32 %v95, 4294901760
  %667 = vmatpush1.msra.mxu0 %v666
  %668 = vmatprep.subr.mxu0 0.0
  %v669 = vand.u32 %v68, 4294901760
  %670 = vmatpush1.msra.mxu0 %v669
  %671 = vmatprep.subr.mxu0 0.0
  %672 = vmatpush2.msra.mxu0 0.0
  %673 = vmatprep.subr.mxu0 0.0
  %674 = vmatpush2.msra.mxu0 0.0
  %675 = vmatprep.subr.mxu0 0.0
  %676 = vmatpush2.msra.mxu0 0.0
  %677 = vmatprep.subr.mxu0 0.0
  %678 = vmatpush2.msra.mxu0 0.0
  %679 = vmatprep.subr.mxu0 0.0
  %680 = vmatpush2.msra.mxu0 0.0
  %681 = vmatprep.subr.mxu0 0.0
  %682 = vmatpush2.msra.mxu0 0.0
  %683 = vmatprep.subr.mxu0 0.0
  %684 = vmatpush2.msra.mxu0 0.0
  %685 = vmatprep.subr.mxu0 0.0
  %686 = vmatpush2.msra.mxu0 0.0
  %687 = vmatprep.subr.mxu0 0.0
  %688 = vmatpush2.msra.mxu0 0.0
  %689 = vmatprep.subr.mxu0 0.0
  %690 = vmatpush2.msra.mxu0 0.0
  %691 = vmatprep.subr.mxu0 0.0
  %692 = vmatpush2.msra.mxu0 0.0
  %693 = vmatprep.subr.mxu0 0.0
  %694 = vmatpush2.msra.mxu0 0.0
  %695 = vmatprep.subr.mxu0 0.0
  %696 = vmatpush2.msra.mxu0 0.0
  %697 = vmatprep.subr.mxu0 0.0
  %698 = vmatpush2.msra.mxu0 0.0
  %699 = vmatprep.subr.mxu0 0.0
  %700 = vmatpush2.msra.mxu0 0.0
  %701 = vmatprep.subr.mxu0 0.0
  %702 = vmatpush2.msra.mxu0 0.0
  %703 = vmatprep.mubr.f32.mxu0 0.0
  %v704 = vand.u32 %v82, 4294901760
  %v705 = vsub.f32 %v82, %v704
  %v706 = vand.u32 %v705, 4294901760
  %v707 = vsub.f32 %v705, %v706
  %v708 = vand.u32 %v707, 4294901760
  %709 = vmatmul.mubr.f32.gmra.mxu0 %v708
  %v710 = vpop.f32.mrf.mxu0
  %v711 = vadd.f32 0.0, %v710
  %v712 = vpop.f32.mrf.mxu0
  %713 = vmatprep.mubr.f32.mxu0 0.0
  %v714 = vand.u32 %v85, 4294901760
  %v715 = vsub.f32 %v85, %v714
  %v716 = vand.u32 %v715, 4294901760
  %v717 = vsub.f32 %v715, %v716
  %v718 = vand.u32 %v717, 4294901760
  %719 = vmatmul.mubr.f32.gmra.mxu0 %v718
  %v720 = vpop.f32.mrf.mxu0
  %v721 = vadd.f32 0.0, %v720
  %v722 = vpop.f32.mrf.mxu0
  %723 = vdwg.mxu0
  %724 = vmatprep.subr.mxu0 0.0
  %725 = vmatpush1.msra.mxu0 0.0
  %726 = vmatprep.subr.mxu0 0.0
  %727 = vmatpush1.msra.mxu0 0.0
  %728 = vmatprep.subr.mxu0 0.0
  %729 = vmatpush1.msra.mxu0 0.0
  %730 = vmatprep.subr.mxu0 0.0
  %731 = vmatpush1.msra.mxu0 0.0
  %732 = vmatprep.subr.mxu0 0.0
  %733 = vmatpush1.msra.mxu0 0.0
  %734 = vmatprep.subr.mxu0 0.0
  %735 = vmatpush1.msra.mxu0 0.0
  %736 = vmatprep.subr.mxu0 0.0
  %737 = vmatpush1.msra.mxu0 0.0
  %738 = vmatprep.subr.mxu0 0.0
  %739 = vmatpush1.msra.mxu0 0.0
  %740 = vmatprep.subr.mxu0 0.0
  %741 = vmatpush1.msra.mxu0 0.0
  %742 = vmatprep.subr.mxu0 0.0
  %743 = vmatpush1.msra.mxu0 0.0
  %744 = vmatprep.subr.mxu0 0.0
  %745 = vmatpush1.msra.mxu0 0.0
  %746 = vmatprep.subr.mxu0 0.0
  %747 = vmatpush1.msra.mxu0 0.0
  %748 = vmatprep.subr.mxu0 0.0
  %749 = vmatpush1.msra.mxu0 0.0
  %750 = vmatprep.subr.mxu0 0.0
  %751 = vmatpush1.msra.mxu0 0.0
  %752 = vmatprep.subr.mxu0 0.0
  %v753 = vand.u32 %v95, 4294901760
  %v754 = vsub.f32 %v95, %v753
  %v755 = vand.u32 %v754, 4294901760
  %v756 = vsub.f32 %v754, %v755
  %v757 = vand.u32 %v756, 4294901760
  %758 = vmatpush1.msra.mxu0 %v757
  %759 = vmatprep.subr.mxu0 0.0
  %v760 = vand.u32 %v68, 4294901760
  %v761 = vsub.f32 %v68, %v760
  %v762 = vand.u32 %v761, 4294901760
  %v763 = vsub.f32 %v761, %v762
  %v764 = vand.u32 %v763, 4294901760
  %765 = vmatpush1.msra.mxu0 %v764
  %766 = vmatprep.subr.mxu0 0.0
  %767 = vmatpush2.msra.mxu0 0.0
  %768 = vmatprep.subr.mxu0 0.0
  %769 = vmatpush2.msra.mxu0 0.0
  %770 = vmatprep.subr.mxu0 0.0
  %771 = vmatpush2.msra.mxu0 0.0
  %772 = vmatprep.subr.mxu0 0.0
  %773 = vmatpush2.msra.mxu0 0.0
  %774 = vmatprep.subr.mxu0 0.0
  %775 = vmatpush2.msra.mxu0 0.0
  %776 = vmatprep.subr.mxu0 0.0
  %777 = vmatpush2.msra.mxu0 0.0
  %778 = vmatprep.subr.mxu0 0.0
  %779 = vmatpush2.msra.mxu0 0.0
  %780 = vmatprep.subr.mxu0 0.0
  %781 = vmatpush2.msra.mxu0 0.0
  %782 = vmatprep.subr.mxu0 0.0
  %783 = vmatpush2.msra.mxu0 0.0
  %784 = vmatprep.subr.mxu0 0.0
  %785 = vmatpush2.msra.mxu0 0.0
  %786 = vmatprep.subr.mxu0 0.0
  %787 = vmatpush2.msra.mxu0 0.0
  %788 = vmatprep.subr.mxu0 0.0
  %789 = vmatpush2.msra.mxu0 0.0
  %790 = vmatprep.subr.mxu0 0.0
  %791 = vmatpush2.msra.mxu0 0.0
  %792 = vmatprep.subr.mxu0 0.0
  %793 = vmatpush2.msra.mxu0 0.0
  %794 = vmatprep.subr.mxu0 0.0
  %795 = vmatpush2.msra.mxu0 0.0
  %796 = vmatprep.subr.mxu0 0.0
  %797 = vmatpush2.msra.mxu0 0.0
  %798 = vmatprep.mubr.f32.mxu0 0.0
  %v799 = vand.u32 %v82, 4294901760
  %800 = vmatmul.mubr.f32.gmra.mxu0 %v799
  %v801 = vpop.f32.mrf.mxu0
  %v802 = vadd.f32 %v711, %v801
  %v803 = vpop.f32.mrf.mxu0
  %804 = vmatprep.mubr.f32.mxu0 0.0
  %v805 = vand.u32 %v85, 4294901760
  %806 = vmatmul.mubr.f32.gmra.mxu0 %v805
  %v807 = vpop.f32.mrf.mxu0
  %v808 = vadd.f32 %v721, %v807
  %v809 = vpop.f32.mrf.mxu0
  %810 = vdwg.mxu0
  %811 = vmatprep.subr.mxu0 0.0
  %812 = vmatpush1.msra.mxu0 0.0
  %813 = vmatprep.subr.mxu0 0.0
  %814 = vmatpush1.msra.mxu0 0.0
  %815 = vmatprep.subr.mxu0 0.0
  %816 = vmatpush1.msra.mxu0 0.0
  %817 = vmatprep.subr.mxu0 0.0
  %818 = vmatpush1.msra.mxu0 0.0
  %819 = vmatprep.subr.mxu0 0.0
  %820 = vmatpush1.msra.mxu0 0.0
  %821 = vmatprep.subr.mxu0 0.0
  %822 = vmatpush1.msra.mxu0 0.0
  %823 = vmatprep.subr.mxu0 0.0
  %824 = vmatpush1.msra.mxu0 0.0
  %825 = vmatprep.subr.mxu0 0.0
  %826 = vmatpush1.msra.mxu0 0.0
  %827 = vmatprep.subr.mxu0 0.0
  %828 = vmatpush1.msra.mxu0 0.0
  %829 = vmatprep.subr.mxu0 0.0
  %830 = vmatpush1.msra.mxu0 0.0
  %831 = vmatprep.subr.mxu0 0.0
  %832 = vmatpush1.msra.mxu0 0.0
  %833 = vmatprep.subr.mxu0 0.0
  %834 = vmatpush1.msra.mxu0 0.0
  %835 = vmatprep.subr.mxu0 0.0
  %836 = vmatpush1.msra.mxu0 0.0
  %837 = vmatprep.subr.mxu0 0.0
  %838 = vmatpush1.msra.mxu0 0.0
  %839 = vmatprep.subr.mxu0 0.0
  %v840 = vand.u32 %v95, 4294901760
  %v841 = vsub.f32 %v95, %v840
  %842 = vmatpush1.msra.mxu0 %v841
  %843 = vmatprep.subr.mxu0 0.0
  %v844 = vand.u32 %v68, 4294901760
  %v845 = vsub.f32 %v68, %v844
  %846 = vmatpush1.msra.mxu0 %v845
  %847 = vmatprep.subr.mxu0 0.0
  %848 = vmatpush2.msra.mxu0 0.0
  %849 = vmatprep.subr.mxu0 0.0
  %850 = vmatpush2.msra.mxu0 0.0
  %851 = vmatprep.subr.mxu0 0.0
  %852 = vmatpush2.msra.mxu0 0.0
  %853 = vmatprep.subr.mxu0 0.0
  %854 = vmatpush2.msra.mxu0 0.0
  %855 = vmatprep.subr.mxu0 0.0
  %856 = vmatpush2.msra.mxu0 0.0
  %857 = vmatprep.subr.mxu0 0.0
  %858 = vmatpush2.msra.mxu0 0.0
  %859 = vmatprep.subr.mxu0 0.0
  %860 = vmatpush2.msra.mxu0 0.0
  %861 = vmatprep.subr.mxu0 0.0
  %862 = vmatpush2.msra.mxu0 0.0
  %863 = vmatprep.subr.mxu0 0.0
  %864 = vmatpush2.msra.mxu0 0.0
  %865 = vmatprep.subr.mxu0 0.0
  %866 = vmatpush2.msra.mxu0 0.0
  %867 = vmatprep.subr.mxu0 0.0
  %868 = vmatpush2.msra.mxu0 0.0
  %869 = vmatprep.subr.mxu0 0.0
  %870 = vmatpush2.msra.mxu0 0.0
  %871 = vmatprep.subr.mxu0 0.0
  %872 = vmatpush2.msra.mxu0 0.0
  %873 = vmatprep.subr.mxu0 0.0
  %874 = vmatpush2.msra.mxu0 0.0
  %875 = vmatprep.subr.mxu0 0.0
  %876 = vmatpush2.msra.mxu0 0.0
  %877 = vmatprep.subr.mxu0 0.0
  %878 = vmatpush2.msra.mxu0 0.0
  %879 = vmatprep.mubr.f32.mxu0 0.0
  %v880 = vand.u32 %v82, 4294901760
  %v881 = vsub.f32 %v82, %v880
  %882 = vmatmul.mubr.f32.gmra.mxu0 %v881
  %v883 = vpop.f32.mrf.mxu0
  %v884 = vadd.f32 %v802, %v883
  %v885 = vpop.f32.mrf.mxu0
  %886 = vmatprep.mubr.f32.mxu0 0.0
  %v887 = vand.u32 %v85, 4294901760
  %v888 = vsub.f32 %v85, %v887
  %889 = vmatmul.mubr.f32.gmra.mxu0 %v888
  %v890 = vpop.f32.mrf.mxu0
  %v891 = vadd.f32 %v808, %v890
  %v892 = vpop.f32.mrf.mxu0
  %893 = vdwg.mxu0
  %894 = vmatprep.subr.mxu0 0.0
  %895 = vmatpush1.msra.mxu0 0.0
  %896 = vmatprep.subr.mxu0 0.0
  %897 = vmatpush1.msra.mxu0 0.0
  %898 = vmatprep.subr.mxu0 0.0
  %899 = vmatpush1.msra.mxu0 0.0
  %900 = vmatprep.subr.mxu0 0.0
  %901 = vmatpush1.msra.mxu0 0.0
  %902 = vmatprep.subr.mxu0 0.0
  %903 = vmatpush1.msra.mxu0 0.0
  %904 = vmatprep.subr.mxu0 0.0
  %905 = vmatpush1.msra.mxu0 0.0
  %906 = vmatprep.subr.mxu0 0.0
  %907 = vmatpush1.msra.mxu0 0.0
  %908 = vmatprep.subr.mxu0 0.0
  %909 = vmatpush1.msra.mxu0 0.0
  %910 = vmatprep.subr.mxu0 0.0
  %911 = vmatpush1.msra.mxu0 0.0
  %912 = vmatprep.subr.mxu0 0.0
  %913 = vmatpush1.msra.mxu0 0.0
  %914 = vmatprep.subr.mxu0 0.0
  %915 = vmatpush1.msra.mxu0 0.0
  %916 = vmatprep.subr.mxu0 0.0
  %917 = vmatpush1.msra.mxu0 0.0
  %918 = vmatprep.subr.mxu0 0.0
  %919 = vmatpush1.msra.mxu0 0.0
  %920 = vmatprep.subr.mxu0 0.0
  %921 = vmatpush1.msra.mxu0 0.0
  %922 = vmatprep.subr.mxu0 0.0
  %v923 = vand.u32 %v95, 4294901760
  %924 = vmatpush1.msra.mxu0 %v923
  %925 = vmatprep.subr.mxu0 0.0
  %v926 = vand.u32 %v68, 4294901760
  %927 = vmatpush1.msra.mxu0 %v926
  %928 = vmatprep.subr.mxu0 0.0
  %929 = vmatpush2.msra.mxu0 0.0
  %930 = vmatprep.subr.mxu0 0.0
  %931 = vmatpush2.msra.mxu0 0.0
  %932 = vmatprep.subr.mxu0 0.0
  %933 = vmatpush2.msra.mxu0 0.0
  %934 = vmatprep.subr.mxu0 0.0
  %935 = vmatpush2.msra.mxu0 0.0
  %936 = vmatprep.subr.mxu0 0.0
  %937 = vmatpush2.msra.mxu0 0.0
  %938 = vmatprep.subr.mxu0 0.0
  %939 = vmatpush2.msra.mxu0 0.0
  %940 = vmatprep.subr.mxu0 0.0
  %941 = vmatpush2.msra.mxu0 0.0
  %942 = vmatprep.subr.mxu0 0.0
  %943 = vmatpush2.msra.mxu0 0.0
  %944 = vmatprep.subr.mxu0 0.0
  %945 = vmatpush2.msra.mxu0 0.0
  %946 = vmatprep.subr.mxu0 0.0
  %947 = vmatpush2.msra.mxu0 0.0
  %948 = vmatprep.subr.mxu0 0.0
  %949 = vmatpush2.msra.mxu0 0.0
  %950 = vmatprep.subr.mxu0 0.0
  %951 = vmatpush2.msra.mxu0 0.0
  %952 = vmatprep.subr.mxu0 0.0
  %953 = vmatpush2.msra.mxu0 0.0
  %954 = vmatprep.subr.mxu0 0.0
  %955 = vmatpush2.msra.mxu0 0.0
  %956 = vmatprep.subr.mxu0 0.0
  %957 = vmatpush2.msra.mxu0 0.0
  %958 = vmatprep.subr.mxu0 0.0
  %959 = vmatpush2.msra.mxu0 0.0
  %960 = vmatprep.mubr.f32.mxu0 0.0
  %v961 = vand.u32 %v82, 4294901760
  %v962 = vsub.f32 %v82, %v961
  %v963 = vand.u32 %v962, 4294901760
  %964 = vmatmul.mubr.f32.gmra.mxu0 %v963
  %v965 = vpop.f32.mrf.mxu0
  %v966 = vadd.f32 %v884, %v965
  %v967 = vpop.f32.mrf.mxu0
  %968 = vmatprep.mubr.f32.mxu0 0.0
  %v969 = vand.u32 %v85, 4294901760
  %v970 = vsub.f32 %v85, %v969
  %v971 = vand.u32 %v970, 4294901760
  %972 = vmatmul.mubr.f32.gmra.mxu0 %v971
  %v973 = vpop.f32.mrf.mxu0
  %v974 = vadd.f32 %v891, %v973
  %v975 = vpop.f32.mrf.mxu0
  %976 = vdwg.mxu0
  %977 = vmatprep.subr.mxu0 0.0
  %978 = vmatpush1.msra.mxu0 0.0
  %979 = vmatprep.subr.mxu0 0.0
  %980 = vmatpush1.msra.mxu0 0.0
  %981 = vmatprep.subr.mxu0 0.0
  %982 = vmatpush1.msra.mxu0 0.0
  %983 = vmatprep.subr.mxu0 0.0
  %984 = vmatpush1.msra.mxu0 0.0
  %985 = vmatprep.subr.mxu0 0.0
  %986 = vmatpush1.msra.mxu0 0.0
  %987 = vmatprep.subr.mxu0 0.0
  %988 = vmatpush1.msra.mxu0 0.0
  %989 = vmatprep.subr.mxu0 0.0
  %990 = vmatpush1.msra.mxu0 0.0
  %991 = vmatprep.subr.mxu0 0.0
  %992 = vmatpush1.msra.mxu0 0.0
  %993 = vmatprep.subr.mxu0 0.0
  %994 = vmatpush1.msra.mxu0 0.0
  %995 = vmatprep.subr.mxu0 0.0
  %996 = vmatpush1.msra.mxu0 0.0
  %997 = vmatprep.subr.mxu0 0.0
  %998 = vmatpush1.msra.mxu0 0.0
  %999 = vmatprep.subr.mxu0 0.0
  %1000 = vmatpush1.msra.mxu0 0.0
  %1001 = vmatprep.subr.mxu0 0.0
  %1002 = vmatpush1.msra.mxu0 0.0
  %1003 = vmatprep.subr.mxu0 0.0
  %1004 = vmatpush1.msra.mxu0 0.0
  %1005 = vmatprep.subr.mxu0 0.0
  %v1006 = vand.u32 %v95, 4294901760
  %v1007 = vsub.f32 %v95, %v1006
  %v1008 = vand.u32 %v1007, 4294901760
  %1009 = vmatpush1.msra.mxu0 %v1008
  %1010 = vmatprep.subr.mxu0 0.0
  %v1011 = vand.u32 %v68, 4294901760
  %v1012 = vsub.f32 %v68, %v1011
  %v1013 = vand.u32 %v1012, 4294901760
  %1014 = vmatpush1.msra.mxu0 %v1013
  %1015 = vmatprep.subr.mxu0 0.0
  %1016 = vmatpush2.msra.mxu0 0.0
  %1017 = vmatprep.subr.mxu0 0.0
  %1018 = vmatpush2.msra.mxu0 0.0
  %1019 = vmatprep.subr.mxu0 0.0
  %1020 = vmatpush2.msra.mxu0 0.0
  %1021 = vmatprep.subr.mxu0 0.0
  %1022 = vmatpush2.msra.mxu0 0.0
  %1023 = vmatprep.subr.mxu0 0.0
  %1024 = vmatpush2.msra.mxu0 0.0
  %1025 = vmatprep.subr.mxu0 0.0
  %1026 = vmatpush2.msra.mxu0 0.0
  %1027 = vmatprep.subr.mxu0 0.0
  %1028 = vmatpush2.msra.mxu0 0.0
  %1029 = vmatprep.subr.mxu0 0.0
  %1030 = vmatpush2.msra.mxu0 0.0
  %1031 = vmatprep.subr.mxu0 0.0
  %1032 = vmatpush2.msra.mxu0 0.0
  %1033 = vmatprep.subr.mxu0 0.0
  %1034 = vmatpush2.msra.mxu0 0.0
  %1035 = vmatprep.subr.mxu0 0.0
  %1036 = vmatpush2.msra.mxu0 0.0
  %1037 = vmatprep.subr.mxu0 0.0
  %1038 = vmatpush2.msra.mxu0 0.0
  %1039 = vmatprep.subr.mxu0 0.0
  %1040 = vmatpush2.msra.mxu0 0.0
  %1041 = vmatprep.subr.mxu0 0.0
  %1042 = vmatpush2.msra.mxu0 0.0
  %1043 = vmatprep.subr.mxu0 0.0
  %1044 = vmatpush2.msra.mxu0 0.0
  %1045 = vmatprep.subr.mxu0 0.0
  %1046 = vmatpush2.msra.mxu0 0.0
  %1047 = vmatprep.mubr.f32.mxu0 0.0
  %v1048 = vand.u32 %v82, 4294901760
  %1049 = vmatmul.mubr.f32.gmra.mxu0 %v1048
  %v1050 = vpop.f32.mrf.mxu0
  %v1051 = vadd.f32 %v966, %v1050
  %v1052 = vpop.f32.mrf.mxu0
  %1053 = vmatprep.mubr.f32.mxu0 0.0
  %v1054 = vand.u32 %v85, 4294901760
  %1055 = vmatmul.mubr.f32.gmra.mxu0 %v1054
  %v1056 = vpop.f32.mrf.mxu0
  %v1057 = vadd.f32 %v974, %v1056
  %v1058 = vpop.f32.mrf.mxu0
  %1059 = vdwg.mxu0
  %1060 = vmatprep.subr.mxu0 0.0
  %1061 = vmatpush1.msra.mxu0 0.0
  %1062 = vmatprep.subr.mxu0 0.0
  %1063 = vmatpush1.msra.mxu0 0.0
  %1064 = vmatprep.subr.mxu0 0.0
  %1065 = vmatpush1.msra.mxu0 0.0
  %1066 = vmatprep.subr.mxu0 0.0
  %1067 = vmatpush1.msra.mxu0 0.0
  %1068 = vmatprep.subr.mxu0 0.0
  %1069 = vmatpush1.msra.mxu0 0.0
  %1070 = vmatprep.subr.mxu0 0.0
  %1071 = vmatpush1.msra.mxu0 0.0
  %1072 = vmatprep.subr.mxu0 0.0
  %1073 = vmatpush1.msra.mxu0 0.0
  %1074 = vmatprep.subr.mxu0 0.0
  %1075 = vmatpush1.msra.mxu0 0.0
  %1076 = vmatprep.subr.mxu0 0.0
  %1077 = vmatpush1.msra.mxu0 0.0
  %1078 = vmatprep.subr.mxu0 0.0
  %1079 = vmatpush1.msra.mxu0 0.0
  %1080 = vmatprep.subr.mxu0 0.0
  %1081 = vmatpush1.msra.mxu0 0.0
  %1082 = vmatprep.subr.mxu0 0.0
  %1083 = vmatpush1.msra.mxu0 0.0
  %1084 = vmatprep.subr.mxu0 0.0
  %1085 = vmatpush1.msra.mxu0 0.0
  %1086 = vmatprep.subr.mxu0 0.0
  %1087 = vmatpush1.msra.mxu0 0.0
  %1088 = vmatprep.subr.mxu0 0.0
  %v1089 = vand.u32 %v95, 4294901760
  %1090 = vmatpush1.msra.mxu0 %v1089
  %1091 = vmatprep.subr.mxu0 0.0
  %v1092 = vand.u32 %v68, 4294901760
  %1093 = vmatpush1.msra.mxu0 %v1092
  %1094 = vmatprep.subr.mxu0 0.0
  %1095 = vmatpush2.msra.mxu0 0.0
  %1096 = vmatprep.subr.mxu0 0.0
  %1097 = vmatpush2.msra.mxu0 0.0
  %1098 = vmatprep.subr.mxu0 0.0
  %1099 = vmatpush2.msra.mxu0 0.0
  %1100 = vmatprep.subr.mxu0 0.0
  %1101 = vmatpush2.msra.mxu0 0.0
  %1102 = vmatprep.subr.mxu0 0.0
  %1103 = vmatpush2.msra.mxu0 0.0
  %1104 = vmatprep.subr.mxu0 0.0
  %1105 = vmatpush2.msra.mxu0 0.0
  %1106 = vmatprep.subr.mxu0 0.0
  %1107 = vmatpush2.msra.mxu0 0.0
  %1108 = vmatprep.subr.mxu0 0.0
  %1109 = vmatpush2.msra.mxu0 0.0
  %1110 = vmatprep.subr.mxu0 0.0
  %1111 = vmatpush2.msra.mxu0 0.0
  %1112 = vmatprep.subr.mxu0 0.0
  %1113 = vmatpush2.msra.mxu0 0.0
  %1114 = vmatprep.subr.mxu0 0.0
  %1115 = vmatpush2.msra.mxu0 0.0
  %1116 = vmatprep.subr.mxu0 0.0
  %1117 = vmatpush2.msra.mxu0 0.0
  %1118 = vmatprep.subr.mxu0 0.0
  %1119 = vmatpush2.msra.mxu0 0.0
  %1120 = vmatprep.subr.mxu0 0.0
  %1121 = vmatpush2.msra.mxu0 0.0
  %1122 = vmatprep.subr.mxu0 0.0
  %1123 = vmatpush2.msra.mxu0 0.0
  %1124 = vmatprep.subr.mxu0 0.0
  %1125 = vmatpush2.msra.mxu0 0.0
  %1126 = vmatprep.mubr.f32.mxu0 0.0
  %v1127 = vand.u32 %v82, 4294901760
  %1128 = vmatmul.mubr.f32.gmra.mxu0 %v1127
  %v1129 = vpop.f32.mrf.mxu0
  %v1130 = vadd.f32 %v1051, %v1129
  %v1131 = vpop.f32.mrf.mxu0
  %1132 = vmatprep.mubr.f32.mxu0 0.0
  %v1133 = vand.u32 %v85, 4294901760
  %1134 = vmatmul.mubr.f32.gmra.mxu0 %v1133
  %v1135 = vpop.f32.mrf.mxu0
  %v1136 = vadd.f32 %v1057, %v1135
  %v1137 = vpop.f32.mrf.mxu0
  %1138 = vdwg.mxu0
  %v1140 = vsel %vm87, %v75, 0
  %v1143 = vsel %vm87, %v76, 0
  %v1146 = vsel %vm87, %v77, 0
  %1148 = vmatprep.subr.mxu0 0.0
  %1149 = vmatpush1.msra.mxu0 0.0
  %1150 = vmatprep.subr.mxu0 0.0
  %1151 = vmatpush1.msra.mxu0 0.0
  %1152 = vmatprep.subr.mxu0 0.0
  %1153 = vmatpush1.msra.mxu0 0.0
  %1154 = vmatprep.subr.mxu0 0.0
  %1155 = vmatpush1.msra.mxu0 0.0
  %1156 = vmatprep.subr.mxu0 0.0
  %1157 = vmatpush1.msra.mxu0 0.0
  %1158 = vmatprep.subr.mxu0 0.0
  %1159 = vmatpush1.msra.mxu0 0.0
  %1160 = vmatprep.subr.mxu0 0.0
  %1161 = vmatpush1.msra.mxu0 0.0
  %1162 = vmatprep.subr.mxu0 0.0
  %1163 = vmatpush1.msra.mxu0 0.0
  %1164 = vmatprep.subr.mxu0 0.0
  %1165 = vmatpush1.msra.mxu0 0.0
  %1166 = vmatprep.subr.mxu0 0.0
  %1167 = vmatpush1.msra.mxu0 0.0
  %1168 = vmatprep.subr.mxu0 0.0
  %1169 = vmatpush1.msra.mxu0 0.0
  %1170 = vmatprep.subr.mxu0 0.0
  %1171 = vmatpush1.msra.mxu0 0.0
  %1172 = vmatprep.subr.mxu0 0.0
  %1173 = vmatpush1.msra.mxu0 0.0
  %1174 = vmatprep.subr.mxu0 0.0
  %1175 = vmatpush1.msra.mxu0 0.0
  %v1176 = vand.u32 %v1143, 4294901760
  %1177 = vmatprep.subr.mxu0 %v1176
  %v1178 = vand.u32 %v1140, 4294901760
  %1179 = vmatpush1.msra.mxu0 %v1178
  %v1180 = vand.u32 %v73, 4294901760
  %1181 = vmatprep.subr.mxu0 %v1180
  %v1182 = vand.u32 %v72, 4294901760
  %1183 = vmatpush1.msra.mxu0 %v1182
  %1184 = vmatprep.subr.mxu0 0.0
  %1185 = vmatpush2.msra.mxu0 0.0
  %1186 = vmatprep.subr.mxu0 0.0
  %1187 = vmatpush2.msra.mxu0 0.0
  %1188 = vmatprep.subr.mxu0 0.0
  %1189 = vmatpush2.msra.mxu0 0.0
  %1190 = vmatprep.subr.mxu0 0.0
  %1191 = vmatpush2.msra.mxu0 0.0
  %1192 = vmatprep.subr.mxu0 0.0
  %1193 = vmatpush2.msra.mxu0 0.0
  %1194 = vmatprep.subr.mxu0 0.0
  %1195 = vmatpush2.msra.mxu0 0.0
  %1196 = vmatprep.subr.mxu0 0.0
  %1197 = vmatpush2.msra.mxu0 0.0
  %1198 = vmatprep.subr.mxu0 0.0
  %1199 = vmatpush2.msra.mxu0 0.0
  %1200 = vmatprep.subr.mxu0 0.0
  %1201 = vmatpush2.msra.mxu0 0.0
  %1202 = vmatprep.subr.mxu0 0.0
  %1203 = vmatpush2.msra.mxu0 0.0
  %1204 = vmatprep.subr.mxu0 0.0
  %1205 = vmatpush2.msra.mxu0 0.0
  %1206 = vmatprep.subr.mxu0 0.0
  %1207 = vmatpush2.msra.mxu0 0.0
  %1208 = vmatprep.subr.mxu0 0.0
  %1209 = vmatpush2.msra.mxu0 0.0
  %1210 = vmatprep.subr.mxu0 0.0
  %1211 = vmatpush2.msra.mxu0 0.0
  %1212 = vmatprep.subr.mxu0 0.0
  %1213 = vmatpush2.msra.mxu0 0.0
  %1214 = vmatprep.subr.mxu0 0.0
  %1215 = vmatpush2.msra.mxu0 0.0
  %1216 = vmatprep.mubr.f32.mxu0 0.0
  %v1217 = vand.u32 %v82, 4294901760
  %v1218 = vsub.f32 %v82, %v1217
  %v1219 = vand.u32 %v1218, 4294901760
  %v1220 = vsub.f32 %v1218, %v1219
  %v1221 = vand.u32 %v1220, 4294901760
  %1222 = vmatmul.mubr.f32.gmra.mxu0 %v1221
  %v1223 = vpop.f32.mrf.mxu0
  %v1224 = vadd.f32 0.0, %v1223
  %v1225 = vpop.f32.mrf.mxu0
  %v1226 = vadd.f32 0.0, %v1225
  %1227 = vmatprep.mubr.f32.mxu0 0.0
  %v1228 = vand.u32 %v85, 4294901760
  %v1229 = vsub.f32 %v85, %v1228
  %v1230 = vand.u32 %v1229, 4294901760
  %v1231 = vsub.f32 %v1229, %v1230
  %v1232 = vand.u32 %v1231, 4294901760
  %1233 = vmatmul.mubr.f32.gmra.mxu0 %v1232
  %v1234 = vpop.f32.mrf.mxu0
  %v1235 = vadd.f32 0.0, %v1234
  %v1236 = vpop.f32.mrf.mxu0
  %v1237 = vadd.f32 0.0, %v1236
  %1238 = vdwg.mxu0
  %1239 = vmatprep.subr.mxu0 0.0
  %1240 = vmatpush1.msra.mxu0 0.0
  %1241 = vmatprep.subr.mxu0 0.0
  %1242 = vmatpush1.msra.mxu0 0.0
  %1243 = vmatprep.subr.mxu0 0.0
  %1244 = vmatpush1.msra.mxu0 0.0
  %1245 = vmatprep.subr.mxu0 0.0
  %1246 = vmatpush1.msra.mxu0 0.0
  %1247 = vmatprep.subr.mxu0 0.0
  %1248 = vmatpush1.msra.mxu0 0.0
  %1249 = vmatprep.subr.mxu0 0.0
  %1250 = vmatpush1.msra.mxu0 0.0
  %1251 = vmatprep.subr.mxu0 0.0
  %1252 = vmatpush1.msra.mxu0 0.0
  %1253 = vmatprep.subr.mxu0 0.0
  %1254 = vmatpush1.msra.mxu0 0.0
  %1255 = vmatprep.subr.mxu0 0.0
  %1256 = vmatpush1.msra.mxu0 0.0
  %1257 = vmatprep.subr.mxu0 0.0
  %1258 = vmatpush1.msra.mxu0 0.0
  %1259 = vmatprep.subr.mxu0 0.0
  %1260 = vmatpush1.msra.mxu0 0.0
  %1261 = vmatprep.subr.mxu0 0.0
  %1262 = vmatpush1.msra.mxu0 0.0
  %1263 = vmatprep.subr.mxu0 0.0
  %1264 = vmatpush1.msra.mxu0 0.0
  %1265 = vmatprep.subr.mxu0 0.0
  %1266 = vmatpush1.msra.mxu0 0.0
  %v1267 = vand.u32 %v1143, 4294901760
  %v1268 = vsub.f32 %v1143, %v1267
  %v1269 = vand.u32 %v1268, 4294901760
  %v1270 = vsub.f32 %v1268, %v1269
  %v1271 = vand.u32 %v1270, 4294901760
  %1272 = vmatprep.subr.mxu0 %v1271
  %v1273 = vand.u32 %v1140, 4294901760
  %v1274 = vsub.f32 %v1140, %v1273
  %v1275 = vand.u32 %v1274, 4294901760
  %v1276 = vsub.f32 %v1274, %v1275
  %v1277 = vand.u32 %v1276, 4294901760
  %1278 = vmatpush1.msra.mxu0 %v1277
  %v1279 = vand.u32 %v73, 4294901760
  %v1280 = vsub.f32 %v73, %v1279
  %v1281 = vand.u32 %v1280, 4294901760
  %v1282 = vsub.f32 %v1280, %v1281
  %v1283 = vand.u32 %v1282, 4294901760
  %1284 = vmatprep.subr.mxu0 %v1283
  %v1285 = vand.u32 %v72, 4294901760
  %v1286 = vsub.f32 %v72, %v1285
  %v1287 = vand.u32 %v1286, 4294901760
  %v1288 = vsub.f32 %v1286, %v1287
  %v1289 = vand.u32 %v1288, 4294901760
  %1290 = vmatpush1.msra.mxu0 %v1289
  %1291 = vmatprep.subr.mxu0 0.0
  %1292 = vmatpush2.msra.mxu0 0.0
  %1293 = vmatprep.subr.mxu0 0.0
  %1294 = vmatpush2.msra.mxu0 0.0
  %1295 = vmatprep.subr.mxu0 0.0
  %1296 = vmatpush2.msra.mxu0 0.0
  %1297 = vmatprep.subr.mxu0 0.0
  %1298 = vmatpush2.msra.mxu0 0.0
  %1299 = vmatprep.subr.mxu0 0.0
  %1300 = vmatpush2.msra.mxu0 0.0
  %1301 = vmatprep.subr.mxu0 0.0
  %1302 = vmatpush2.msra.mxu0 0.0
  %1303 = vmatprep.subr.mxu0 0.0
  %1304 = vmatpush2.msra.mxu0 0.0
  %1305 = vmatprep.subr.mxu0 0.0
  %1306 = vmatpush2.msra.mxu0 0.0
  %1307 = vmatprep.subr.mxu0 0.0
  %1308 = vmatpush2.msra.mxu0 0.0
  %1309 = vmatprep.subr.mxu0 0.0
  %1310 = vmatpush2.msra.mxu0 0.0
  %1311 = vmatprep.subr.mxu0 0.0
  %1312 = vmatpush2.msra.mxu0 0.0
  %1313 = vmatprep.subr.mxu0 0.0
  %1314 = vmatpush2.msra.mxu0 0.0
  %1315 = vmatprep.subr.mxu0 0.0
  %1316 = vmatpush2.msra.mxu0 0.0
  %1317 = vmatprep.subr.mxu0 0.0
  %1318 = vmatpush2.msra.mxu0 0.0
  %1319 = vmatprep.subr.mxu0 0.0
  %1320 = vmatpush2.msra.mxu0 0.0
  %1321 = vmatprep.subr.mxu0 0.0
  %1322 = vmatpush2.msra.mxu0 0.0
  %1323 = vmatprep.mubr.f32.mxu0 0.0
  %v1324 = vand.u32 %v82, 4294901760
  %1325 = vmatmul.mubr.f32.gmra.mxu0 %v1324
  %v1326 = vpop.f32.mrf.mxu0
  %v1327 = vadd.f32 %v1224, %v1326
  %v1328 = vpop.f32.mrf.mxu0
  %v1329 = vadd.f32 %v1226, %v1328
  %1330 = vmatprep.mubr.f32.mxu0 0.0
  %v1331 = vand.u32 %v85, 4294901760
  %1332 = vmatmul.mubr.f32.gmra.mxu0 %v1331
  %v1333 = vpop.f32.mrf.mxu0
  %v1334 = vadd.f32 %v1235, %v1333
  %v1335 = vpop.f32.mrf.mxu0
  %v1336 = vadd.f32 %v1237, %v1335
  %1337 = vdwg.mxu0
  %1338 = vmatprep.subr.mxu0 0.0
  %1339 = vmatpush1.msra.mxu0 0.0
  %1340 = vmatprep.subr.mxu0 0.0
  %1341 = vmatpush1.msra.mxu0 0.0
  %1342 = vmatprep.subr.mxu0 0.0
  %1343 = vmatpush1.msra.mxu0 0.0
  %1344 = vmatprep.subr.mxu0 0.0
  %1345 = vmatpush1.msra.mxu0 0.0
  %1346 = vmatprep.subr.mxu0 0.0
  %1347 = vmatpush1.msra.mxu0 0.0
  %1348 = vmatprep.subr.mxu0 0.0
  %1349 = vmatpush1.msra.mxu0 0.0
  %1350 = vmatprep.subr.mxu0 0.0
  %1351 = vmatpush1.msra.mxu0 0.0
  %1352 = vmatprep.subr.mxu0 0.0
  %1353 = vmatpush1.msra.mxu0 0.0
  %1354 = vmatprep.subr.mxu0 0.0
  %1355 = vmatpush1.msra.mxu0 0.0
  %1356 = vmatprep.subr.mxu0 0.0
  %1357 = vmatpush1.msra.mxu0 0.0
  %1358 = vmatprep.subr.mxu0 0.0
  %1359 = vmatpush1.msra.mxu0 0.0
  %1360 = vmatprep.subr.mxu0 0.0
  %1361 = vmatpush1.msra.mxu0 0.0
  %1362 = vmatprep.subr.mxu0 0.0
  %1363 = vmatpush1.msra.mxu0 0.0
  %1364 = vmatprep.subr.mxu0 0.0
  %1365 = vmatpush1.msra.mxu0 0.0
  %v1366 = vand.u32 %v1143, 4294901760
  %v1367 = vsub.f32 %v1143, %v1366
  %1368 = vmatprep.subr.mxu0 %v1367
  %v1369 = vand.u32 %v1140, 4294901760
  %v1370 = vsub.f32 %v1140, %v1369
  %1371 = vmatpush1.msra.mxu0 %v1370
  %v1372 = vand.u32 %v73, 4294901760
  %v1373 = vsub.f32 %v73, %v1372
  %1374 = vmatprep.subr.mxu0 %v1373
  %v1375 = vand.u32 %v72, 4294901760
  %v1376 = vsub.f32 %v72, %v1375
  %1377 = vmatpush1.msra.mxu0 %v1376
  %1378 = vmatprep.subr.mxu0 0.0
  %1379 = vmatpush2.msra.mxu0 0.0
  %1380 = vmatprep.subr.mxu0 0.0
  %1381 = vmatpush2.msra.mxu0 0.0
  %1382 = vmatprep.subr.mxu0 0.0
  %1383 = vmatpush2.msra.mxu0 0.0
  %1384 = vmatprep.subr.mxu0 0.0
  %1385 = vmatpush2.msra.mxu0 0.0
  %1386 = vmatprep.subr.mxu0 0.0
  %1387 = vmatpush2.msra.mxu0 0.0
  %1388 = vmatprep.subr.mxu0 0.0
  %1389 = vmatpush2.msra.mxu0 0.0
  %1390 = vmatprep.subr.mxu0 0.0
  %1391 = vmatpush2.msra.mxu0 0.0
  %1392 = vmatprep.subr.mxu0 0.0
  %1393 = vmatpush2.msra.mxu0 0.0
  %1394 = vmatprep.subr.mxu0 0.0
  %1395 = vmatpush2.msra.mxu0 0.0
  %1396 = vmatprep.subr.mxu0 0.0
  %1397 = vmatpush2.msra.mxu0 0.0
  %1398 = vmatprep.subr.mxu0 0.0
  %1399 = vmatpush2.msra.mxu0 0.0
  %1400 = vmatprep.subr.mxu0 0.0
  %1401 = vmatpush2.msra.mxu0 0.0
  %1402 = vmatprep.subr.mxu0 0.0
  %1403 = vmatpush2.msra.mxu0 0.0
  %1404 = vmatprep.subr.mxu0 0.0
  %1405 = vmatpush2.msra.mxu0 0.0
  %1406 = vmatprep.subr.mxu0 0.0
  %1407 = vmatpush2.msra.mxu0 0.0
  %1408 = vmatprep.subr.mxu0 0.0
  %1409 = vmatpush2.msra.mxu0 0.0
  %1410 = vmatprep.mubr.f32.mxu0 0.0
  %v1411 = vand.u32 %v82, 4294901760
  %v1412 = vsub.f32 %v82, %v1411
  %1413 = vmatmul.mubr.f32.gmra.mxu0 %v1412
  %v1414 = vpop.f32.mrf.mxu0
  %v1415 = vadd.f32 %v1327, %v1414
  %v1416 = vpop.f32.mrf.mxu0
  %v1417 = vadd.f32 %v1329, %v1416
  %1418 = vmatprep.mubr.f32.mxu0 0.0
  %v1419 = vand.u32 %v85, 4294901760
  %v1420 = vsub.f32 %v85, %v1419
  %1421 = vmatmul.mubr.f32.gmra.mxu0 %v1420
  %v1422 = vpop.f32.mrf.mxu0
  %v1423 = vadd.f32 %v1334, %v1422
  %v1424 = vpop.f32.mrf.mxu0
  %v1425 = vadd.f32 %v1336, %v1424
  %1426 = vdwg.mxu0
  %1427 = vmatprep.subr.mxu0 0.0
  %1428 = vmatpush1.msra.mxu0 0.0
  %1429 = vmatprep.subr.mxu0 0.0
  %1430 = vmatpush1.msra.mxu0 0.0
  %1431 = vmatprep.subr.mxu0 0.0
  %1432 = vmatpush1.msra.mxu0 0.0
  %1433 = vmatprep.subr.mxu0 0.0
  %1434 = vmatpush1.msra.mxu0 0.0
  %1435 = vmatprep.subr.mxu0 0.0
  %1436 = vmatpush1.msra.mxu0 0.0
  %1437 = vmatprep.subr.mxu0 0.0
  %1438 = vmatpush1.msra.mxu0 0.0
  %1439 = vmatprep.subr.mxu0 0.0
  %1440 = vmatpush1.msra.mxu0 0.0
  %1441 = vmatprep.subr.mxu0 0.0
  %1442 = vmatpush1.msra.mxu0 0.0
  %1443 = vmatprep.subr.mxu0 0.0
  %1444 = vmatpush1.msra.mxu0 0.0
  %1445 = vmatprep.subr.mxu0 0.0
  %1446 = vmatpush1.msra.mxu0 0.0
  %1447 = vmatprep.subr.mxu0 0.0
  %1448 = vmatpush1.msra.mxu0 0.0
  %1449 = vmatprep.subr.mxu0 0.0
  %1450 = vmatpush1.msra.mxu0 0.0
  %1451 = vmatprep.subr.mxu0 0.0
  %1452 = vmatpush1.msra.mxu0 0.0
  %1453 = vmatprep.subr.mxu0 0.0
  %1454 = vmatpush1.msra.mxu0 0.0
  %v1455 = vand.u32 %v1143, 4294901760
  %1456 = vmatprep.subr.mxu0 %v1455
  %v1457 = vand.u32 %v1140, 4294901760
  %1458 = vmatpush1.msra.mxu0 %v1457
  %v1459 = vand.u32 %v73, 4294901760
  %1460 = vmatprep.subr.mxu0 %v1459
  %v1461 = vand.u32 %v72, 4294901760
  %1462 = vmatpush1.msra.mxu0 %v1461
  %1463 = vmatprep.subr.mxu0 0.0
  %1464 = vmatpush2.msra.mxu0 0.0
  %1465 = vmatprep.subr.mxu0 0.0
  %1466 = vmatpush2.msra.mxu0 0.0
  %1467 = vmatprep.subr.mxu0 0.0
  %1468 = vmatpush2.msra.mxu0 0.0
  %1469 = vmatprep.subr.mxu0 0.0
  %1470 = vmatpush2.msra.mxu0 0.0
  %1471 = vmatprep.subr.mxu0 0.0
  %1472 = vmatpush2.msra.mxu0 0.0
  %1473 = vmatprep.subr.mxu0 0.0
  %1474 = vmatpush2.msra.mxu0 0.0
  %1475 = vmatprep.subr.mxu0 0.0
  %1476 = vmatpush2.msra.mxu0 0.0
  %1477 = vmatprep.subr.mxu0 0.0
  %1478 = vmatpush2.msra.mxu0 0.0
  %1479 = vmatprep.subr.mxu0 0.0
  %1480 = vmatpush2.msra.mxu0 0.0
  %1481 = vmatprep.subr.mxu0 0.0
  %1482 = vmatpush2.msra.mxu0 0.0
  %1483 = vmatprep.subr.mxu0 0.0
  %1484 = vmatpush2.msra.mxu0 0.0
  %1485 = vmatprep.subr.mxu0 0.0
  %1486 = vmatpush2.msra.mxu0 0.0
  %1487 = vmatprep.subr.mxu0 0.0
  %1488 = vmatpush2.msra.mxu0 0.0
  %1489 = vmatprep.subr.mxu0 0.0
  %1490 = vmatpush2.msra.mxu0 0.0
  %1491 = vmatprep.subr.mxu0 0.0
  %1492 = vmatpush2.msra.mxu0 0.0
  %1493 = vmatprep.subr.mxu0 0.0
  %1494 = vmatpush2.msra.mxu0 0.0
  %1495 = vmatprep.mubr.f32.mxu0 0.0
  %v1496 = vand.u32 %v82, 4294901760
  %v1497 = vsub.f32 %v82, %v1496
  %v1498 = vand.u32 %v1497, 4294901760
  %1499 = vmatmul.mubr.f32.gmra.mxu0 %v1498
  %v1500 = vpop.f32.mrf.mxu0
  %v1501 = vadd.f32 %v1415, %v1500
  %v1502 = vpop.f32.mrf.mxu0
  %v1503 = vadd.f32 %v1417, %v1502
  %1504 = vmatprep.mubr.f32.mxu0 0.0
  %v1505 = vand.u32 %v85, 4294901760
  %v1506 = vsub.f32 %v85, %v1505
  %v1507 = vand.u32 %v1506, 4294901760
  %1508 = vmatmul.mubr.f32.gmra.mxu0 %v1507
  %v1509 = vpop.f32.mrf.mxu0
  %v1510 = vadd.f32 %v1423, %v1509
  %v1511 = vpop.f32.mrf.mxu0
  %v1512 = vadd.f32 %v1425, %v1511
  %1513 = vdwg.mxu0
  %1514 = vmatprep.subr.mxu0 0.0
  %1515 = vmatpush1.msra.mxu0 0.0
  %1516 = vmatprep.subr.mxu0 0.0
  %1517 = vmatpush1.msra.mxu0 0.0
  %1518 = vmatprep.subr.mxu0 0.0
  %1519 = vmatpush1.msra.mxu0 0.0
  %1520 = vmatprep.subr.mxu0 0.0
  %1521 = vmatpush1.msra.mxu0 0.0
  %1522 = vmatprep.subr.mxu0 0.0
  %1523 = vmatpush1.msra.mxu0 0.0
  %1524 = vmatprep.subr.mxu0 0.0
  %1525 = vmatpush1.msra.mxu0 0.0
  %1526 = vmatprep.subr.mxu0 0.0
  %1527 = vmatpush1.msra.mxu0 0.0
  %1528 = vmatprep.subr.mxu0 0.0
  %1529 = vmatpush1.msra.mxu0 0.0
  %1530 = vmatprep.subr.mxu0 0.0
  %1531 = vmatpush1.msra.mxu0 0.0
  %1532 = vmatprep.subr.mxu0 0.0
  %1533 = vmatpush1.msra.mxu0 0.0
  %1534 = vmatprep.subr.mxu0 0.0
  %1535 = vmatpush1.msra.mxu0 0.0
  %1536 = vmatprep.subr.mxu0 0.0
  %1537 = vmatpush1.msra.mxu0 0.0
  %1538 = vmatprep.subr.mxu0 0.0
  %1539 = vmatpush1.msra.mxu0 0.0
  %1540 = vmatprep.subr.mxu0 0.0
  %1541 = vmatpush1.msra.mxu0 0.0
  %v1542 = vand.u32 %v1143, 4294901760
  %v1543 = vsub.f32 %v1143, %v1542
  %v1544 = vand.u32 %v1543, 4294901760
  %1545 = vmatprep.subr.mxu0 %v1544
  %v1546 = vand.u32 %v1140, 4294901760
  %v1547 = vsub.f32 %v1140, %v1546
  %v1548 = vand.u32 %v1547, 4294901760
  %1549 = vmatpush1.msra.mxu0 %v1548
  %v1550 = vand.u32 %v73, 4294901760
  %v1551 = vsub.f32 %v73, %v1550
  %v1552 = vand.u32 %v1551, 4294901760
  %1553 = vmatprep.subr.mxu0 %v1552
  %v1554 = vand.u32 %v72, 4294901760
  %v1555 = vsub.f32 %v72, %v1554
  %v1556 = vand.u32 %v1555, 4294901760
  %1557 = vmatpush1.msra.mxu0 %v1556
  %1558 = vmatprep.subr.mxu0 0.0
  %1559 = vmatpush2.msra.mxu0 0.0
  %1560 = vmatprep.subr.mxu0 0.0
  %1561 = vmatpush2.msra.mxu0 0.0
  %1562 = vmatprep.subr.mxu0 0.0
  %1563 = vmatpush2.msra.mxu0 0.0
  %1564 = vmatprep.subr.mxu0 0.0
  %1565 = vmatpush2.msra.mxu0 0.0
  %1566 = vmatprep.subr.mxu0 0.0
  %1567 = vmatpush2.msra.mxu0 0.0
  %1568 = vmatprep.subr.mxu0 0.0
  %1569 = vmatpush2.msra.mxu0 0.0
  %1570 = vmatprep.subr.mxu0 0.0
  %1571 = vmatpush2.msra.mxu0 0.0
  %1572 = vmatprep.subr.mxu0 0.0
  %1573 = vmatpush2.msra.mxu0 0.0
  %1574 = vmatprep.subr.mxu0 0.0
  %1575 = vmatpush2.msra.mxu0 0.0
  %1576 = vmatprep.subr.mxu0 0.0
  %1577 = vmatpush2.msra.mxu0 0.0
  %1578 = vmatprep.subr.mxu0 0.0
  %1579 = vmatpush2.msra.mxu0 0.0
  %1580 = vmatprep.subr.mxu0 0.0
  %1581 = vmatpush2.msra.mxu0 0.0
  %1582 = vmatprep.subr.mxu0 0.0
  %1583 = vmatpush2.msra.mxu0 0.0
  %1584 = vmatprep.subr.mxu0 0.0
  %1585 = vmatpush2.msra.mxu0 0.0
  %1586 = vmatprep.subr.mxu0 0.0
  %1587 = vmatpush2.msra.mxu0 0.0
  %1588 = vmatprep.subr.mxu0 0.0
  %1589 = vmatpush2.msra.mxu0 0.0
  %1590 = vmatprep.mubr.f32.mxu0 0.0
  %v1591 = vand.u32 %v82, 4294901760
  %1592 = vmatmul.mubr.f32.gmra.mxu0 %v1591
  %v1593 = vpop.f32.mrf.mxu0
  %v1594 = vadd.f32 %v1501, %v1593
  %v1595 = vpop.f32.mrf.mxu0
  %v1596 = vadd.f32 %v1503, %v1595
  %1597 = vmatprep.mubr.f32.mxu0 0.0
  %v1598 = vand.u32 %v85, 4294901760
  %1599 = vmatmul.mubr.f32.gmra.mxu0 %v1598
  %v1600 = vpop.f32.mrf.mxu0
  %v1601 = vadd.f32 %v1510, %v1600
  %v1602 = vpop.f32.mrf.mxu0
  %v1603 = vadd.f32 %v1512, %v1602
  %1604 = vdwg.mxu0
  %1605 = vmatprep.subr.mxu0 0.0
  %1606 = vmatpush1.msra.mxu0 0.0
  %1607 = vmatprep.subr.mxu0 0.0
  %1608 = vmatpush1.msra.mxu0 0.0
  %1609 = vmatprep.subr.mxu0 0.0
  %1610 = vmatpush1.msra.mxu0 0.0
  %1611 = vmatprep.subr.mxu0 0.0
  %1612 = vmatpush1.msra.mxu0 0.0
  %1613 = vmatprep.subr.mxu0 0.0
  %1614 = vmatpush1.msra.mxu0 0.0
  %1615 = vmatprep.subr.mxu0 0.0
  %1616 = vmatpush1.msra.mxu0 0.0
  %1617 = vmatprep.subr.mxu0 0.0
  %1618 = vmatpush1.msra.mxu0 0.0
  %1619 = vmatprep.subr.mxu0 0.0
  %1620 = vmatpush1.msra.mxu0 0.0
  %1621 = vmatprep.subr.mxu0 0.0
  %1622 = vmatpush1.msra.mxu0 0.0
  %1623 = vmatprep.subr.mxu0 0.0
  %1624 = vmatpush1.msra.mxu0 0.0
  %1625 = vmatprep.subr.mxu0 0.0
  %1626 = vmatpush1.msra.mxu0 0.0
  %1627 = vmatprep.subr.mxu0 0.0
  %1628 = vmatpush1.msra.mxu0 0.0
  %1629 = vmatprep.subr.mxu0 0.0
  %1630 = vmatpush1.msra.mxu0 0.0
  %1631 = vmatprep.subr.mxu0 0.0
  %1632 = vmatpush1.msra.mxu0 0.0
  %v1633 = vand.u32 %v1143, 4294901760
  %1634 = vmatprep.subr.mxu0 %v1633
  %v1635 = vand.u32 %v1140, 4294901760
  %1636 = vmatpush1.msra.mxu0 %v1635
  %v1637 = vand.u32 %v73, 4294901760
  %1638 = vmatprep.subr.mxu0 %v1637
  %v1639 = vand.u32 %v72, 4294901760
  %1640 = vmatpush1.msra.mxu0 %v1639
  %1641 = vmatprep.subr.mxu0 0.0
  %1642 = vmatpush2.msra.mxu0 0.0
  %1643 = vmatprep.subr.mxu0 0.0
  %1644 = vmatpush2.msra.mxu0 0.0
  %1645 = vmatprep.subr.mxu0 0.0
  %1646 = vmatpush2.msra.mxu0 0.0
  %1647 = vmatprep.subr.mxu0 0.0
  %1648 = vmatpush2.msra.mxu0 0.0
  %1649 = vmatprep.subr.mxu0 0.0
  %1650 = vmatpush2.msra.mxu0 0.0
  %1651 = vmatprep.subr.mxu0 0.0
  %1652 = vmatpush2.msra.mxu0 0.0
  %1653 = vmatprep.subr.mxu0 0.0
  %1654 = vmatpush2.msra.mxu0 0.0
  %1655 = vmatprep.subr.mxu0 0.0
  %1656 = vmatpush2.msra.mxu0 0.0
  %1657 = vmatprep.subr.mxu0 0.0
  %1658 = vmatpush2.msra.mxu0 0.0
  %1659 = vmatprep.subr.mxu0 0.0
  %1660 = vmatpush2.msra.mxu0 0.0
  %1661 = vmatprep.subr.mxu0 0.0
  %1662 = vmatpush2.msra.mxu0 0.0
  %1663 = vmatprep.subr.mxu0 0.0
  %1664 = vmatpush2.msra.mxu0 0.0
  %1665 = vmatprep.subr.mxu0 0.0
  %1666 = vmatpush2.msra.mxu0 0.0
  %1667 = vmatprep.subr.mxu0 0.0
  %1668 = vmatpush2.msra.mxu0 0.0
  %1669 = vmatprep.subr.mxu0 0.0
  %1670 = vmatpush2.msra.mxu0 0.0
  %1671 = vmatprep.subr.mxu0 0.0
  %1672 = vmatpush2.msra.mxu0 0.0
  %1673 = vmatprep.mubr.f32.mxu0 0.0
  %v1674 = vand.u32 %v82, 4294901760
  %1675 = vmatmul.mubr.f32.gmra.mxu0 %v1674
  %v1676 = vpop.f32.mrf.mxu0
  %v1677 = vadd.f32 %v1594, %v1676
  %v1678 = vpop.f32.mrf.mxu0
  %v1679 = vadd.f32 %v1596, %v1678
  %1680 = vmatprep.mubr.f32.mxu0 0.0
  %v1681 = vand.u32 %v85, 4294901760
  %1682 = vmatmul.mubr.f32.gmra.mxu0 %v1681
  %v1683 = vpop.f32.mrf.mxu0
  %v1684 = vadd.f32 %v1601, %v1683
  %v1685 = vpop.f32.mrf.mxu0
  %v1686 = vadd.f32 %v1603, %v1685
  %1687 = vdwg.mxu0
  %1688 = vmatprep.subr.mxu0 0.0
  %1689 = vmatpush1.msra.mxu0 0.0
  %1690 = vmatprep.subr.mxu0 0.0
  %1691 = vmatpush1.msra.mxu0 0.0
  %1692 = vmatprep.subr.mxu0 0.0
  %1693 = vmatpush1.msra.mxu0 0.0
  %1694 = vmatprep.subr.mxu0 0.0
  %1695 = vmatpush1.msra.mxu0 0.0
  %1696 = vmatprep.subr.mxu0 0.0
  %1697 = vmatpush1.msra.mxu0 0.0
  %1698 = vmatprep.subr.mxu0 0.0
  %1699 = vmatpush1.msra.mxu0 0.0
  %1700 = vmatprep.subr.mxu0 0.0
  %1701 = vmatpush1.msra.mxu0 0.0
  %1702 = vmatprep.subr.mxu0 0.0
  %1703 = vmatpush1.msra.mxu0 0.0
  %1704 = vmatprep.subr.mxu0 0.0
  %1705 = vmatpush1.msra.mxu0 0.0
  %1706 = vmatprep.subr.mxu0 0.0
  %1707 = vmatpush1.msra.mxu0 0.0
  %1708 = vmatprep.subr.mxu0 0.0
  %1709 = vmatpush1.msra.mxu0 0.0
  %1710 = vmatprep.subr.mxu0 0.0
  %1711 = vmatpush1.msra.mxu0 0.0
  %1712 = vmatprep.subr.mxu0 0.0
  %1713 = vmatpush1.msra.mxu0 0.0
  %1714 = vmatprep.subr.mxu0 0.0
  %1715 = vmatpush1.msra.mxu0 0.0
  %1716 = vmatprep.subr.mxu0 0.0
  %v1717 = vand.u32 %v1146, 4294901760
  %1718 = vmatpush1.msra.mxu0 %v1717
  %1719 = vmatprep.subr.mxu0 0.0
  %v1720 = vand.u32 %v74, 4294901760
  %1721 = vmatpush1.msra.mxu0 %v1720
  %1722 = vmatprep.subr.mxu0 0.0
  %1723 = vmatpush2.msra.mxu0 0.0
  %1724 = vmatprep.subr.mxu0 0.0
  %1725 = vmatpush2.msra.mxu0 0.0
  %1726 = vmatprep.subr.mxu0 0.0
  %1727 = vmatpush2.msra.mxu0 0.0
  %1728 = vmatprep.subr.mxu0 0.0
  %1729 = vmatpush2.msra.mxu0 0.0
  %1730 = vmatprep.subr.mxu0 0.0
  %1731 = vmatpush2.msra.mxu0 0.0
  %1732 = vmatprep.subr.mxu0 0.0
  %1733 = vmatpush2.msra.mxu0 0.0
  %1734 = vmatprep.subr.mxu0 0.0
  %1735 = vmatpush2.msra.mxu0 0.0
  %1736 = vmatprep.subr.mxu0 0.0
  %1737 = vmatpush2.msra.mxu0 0.0
  %1738 = vmatprep.subr.mxu0 0.0
  %1739 = vmatpush2.msra.mxu0 0.0
  %1740 = vmatprep.subr.mxu0 0.0
  %1741 = vmatpush2.msra.mxu0 0.0
  %1742 = vmatprep.subr.mxu0 0.0
  %1743 = vmatpush2.msra.mxu0 0.0
  %1744 = vmatprep.subr.mxu0 0.0
  %1745 = vmatpush2.msra.mxu0 0.0
  %1746 = vmatprep.subr.mxu0 0.0
  %1747 = vmatpush2.msra.mxu0 0.0
  %1748 = vmatprep.subr.mxu0 0.0
  %1749 = vmatpush2.msra.mxu0 0.0
  %1750 = vmatprep.subr.mxu0 0.0
  %1751 = vmatpush2.msra.mxu0 0.0
  %1752 = vmatprep.subr.mxu0 0.0
  %1753 = vmatpush2.msra.mxu0 0.0
  %1754 = vmatprep.mubr.f32.mxu0 0.0
  %v1755 = vand.u32 %v82, 4294901760
  %v1756 = vsub.f32 %v82, %v1755
  %v1757 = vand.u32 %v1756, 4294901760
  %v1758 = vsub.f32 %v1756, %v1757
  %v1759 = vand.u32 %v1758, 4294901760
  %1760 = vmatmul.mubr.f32.gmra.mxu0 %v1759
  %v1761 = vpop.f32.mrf.mxu0
  %v1762 = vadd.f32 0.0, %v1761
  %v1763 = vpop.f32.mrf.mxu0
  %1764 = vmatprep.mubr.f32.mxu0 0.0
  %v1765 = vand.u32 %v85, 4294901760
  %v1766 = vsub.f32 %v85, %v1765
  %v1767 = vand.u32 %v1766, 4294901760
  %v1768 = vsub.f32 %v1766, %v1767
  %v1769 = vand.u32 %v1768, 4294901760
  %1770 = vmatmul.mubr.f32.gmra.mxu0 %v1769
  %v1771 = vpop.f32.mrf.mxu0
  %v1772 = vadd.f32 0.0, %v1771
  %v1773 = vpop.f32.mrf.mxu0
  %1774 = vdwg.mxu0
  %1775 = vmatprep.subr.mxu0 0.0
  %1776 = vmatpush1.msra.mxu0 0.0
  %1777 = vmatprep.subr.mxu0 0.0
  %1778 = vmatpush1.msra.mxu0 0.0
  %1779 = vmatprep.subr.mxu0 0.0
  %1780 = vmatpush1.msra.mxu0 0.0
  %1781 = vmatprep.subr.mxu0 0.0
  %1782 = vmatpush1.msra.mxu0 0.0
  %1783 = vmatprep.subr.mxu0 0.0
  %1784 = vmatpush1.msra.mxu0 0.0
  %1785 = vmatprep.subr.mxu0 0.0
  %1786 = vmatpush1.msra.mxu0 0.0
  %1787 = vmatprep.subr.mxu0 0.0
  %1788 = vmatpush1.msra.mxu0 0.0
  %1789 = vmatprep.subr.mxu0 0.0
  %1790 = vmatpush1.msra.mxu0 0.0
  %1791 = vmatprep.subr.mxu0 0.0
  %1792 = vmatpush1.msra.mxu0 0.0
  %1793 = vmatprep.subr.mxu0 0.0
  %1794 = vmatpush1.msra.mxu0 0.0
  %1795 = vmatprep.subr.mxu0 0.0
  %1796 = vmatpush1.msra.mxu0 0.0
  %1797 = vmatprep.subr.mxu0 0.0
  %1798 = vmatpush1.msra.mxu0 0.0
  %1799 = vmatprep.subr.mxu0 0.0
  %1800 = vmatpush1.msra.mxu0 0.0
  %1801 = vmatprep.subr.mxu0 0.0
  %1802 = vmatpush1.msra.mxu0 0.0
  %1803 = vmatprep.subr.mxu0 0.0
  %v1804 = vand.u32 %v1146, 4294901760
  %v1805 = vsub.f32 %v1146, %v1804
  %v1806 = vand.u32 %v1805, 4294901760
  %v1807 = vsub.f32 %v1805, %v1806
  %v1808 = vand.u32 %v1807, 4294901760
  %1809 = vmatpush1.msra.mxu0 %v1808
  %1810 = vmatprep.subr.mxu0 0.0
  %v1811 = vand.u32 %v74, 4294901760
  %v1812 = vsub.f32 %v74, %v1811
  %v1813 = vand.u32 %v1812, 4294901760
  %v1814 = vsub.f32 %v1812, %v1813
  %v1815 = vand.u32 %v1814, 4294901760
  %1816 = vmatpush1.msra.mxu0 %v1815
  %1817 = vmatprep.subr.mxu0 0.0
  %1818 = vmatpush2.msra.mxu0 0.0
  %1819 = vmatprep.subr.mxu0 0.0
  %1820 = vmatpush2.msra.mxu0 0.0
  %1821 = vmatprep.subr.mxu0 0.0
  %1822 = vmatpush2.msra.mxu0 0.0
  %1823 = vmatprep.subr.mxu0 0.0
  %1824 = vmatpush2.msra.mxu0 0.0
  %1825 = vmatprep.subr.mxu0 0.0
  %1826 = vmatpush2.msra.mxu0 0.0
  %1827 = vmatprep.subr.mxu0 0.0
  %1828 = vmatpush2.msra.mxu0 0.0
  %1829 = vmatprep.subr.mxu0 0.0
  %1830 = vmatpush2.msra.mxu0 0.0
  %1831 = vmatprep.subr.mxu0 0.0
  %1832 = vmatpush2.msra.mxu0 0.0
  %1833 = vmatprep.subr.mxu0 0.0
  %1834 = vmatpush2.msra.mxu0 0.0
  %1835 = vmatprep.subr.mxu0 0.0
  %1836 = vmatpush2.msra.mxu0 0.0
  %1837 = vmatprep.subr.mxu0 0.0
  %1838 = vmatpush2.msra.mxu0 0.0
  %1839 = vmatprep.subr.mxu0 0.0
  %1840 = vmatpush2.msra.mxu0 0.0
  %1841 = vmatprep.subr.mxu0 0.0
  %1842 = vmatpush2.msra.mxu0 0.0
  %1843 = vmatprep.subr.mxu0 0.0
  %1844 = vmatpush2.msra.mxu0 0.0
  %1845 = vmatprep.subr.mxu0 0.0
  %1846 = vmatpush2.msra.mxu0 0.0
  %1847 = vmatprep.subr.mxu0 0.0
  %1848 = vmatpush2.msra.mxu0 0.0
  %1849 = vmatprep.mubr.f32.mxu0 0.0
  %v1850 = vand.u32 %v82, 4294901760
  %1851 = vmatmul.mubr.f32.gmra.mxu0 %v1850
  %v1852 = vpop.f32.mrf.mxu0
  %v1853 = vadd.f32 %v1762, %v1852
  %v1854 = vpop.f32.mrf.mxu0
  %1855 = vmatprep.mubr.f32.mxu0 0.0
  %v1856 = vand.u32 %v85, 4294901760
  %1857 = vmatmul.mubr.f32.gmra.mxu0 %v1856
  %v1858 = vpop.f32.mrf.mxu0
  %v1859 = vadd.f32 %v1772, %v1858
  %v1860 = vpop.f32.mrf.mxu0
  %1861 = vdwg.mxu0
  %1862 = vmatprep.subr.mxu0 0.0
  %1863 = vmatpush1.msra.mxu0 0.0
  %1864 = vmatprep.subr.mxu0 0.0
  %1865 = vmatpush1.msra.mxu0 0.0
  %1866 = vmatprep.subr.mxu0 0.0
  %1867 = vmatpush1.msra.mxu0 0.0
  %1868 = vmatprep.subr.mxu0 0.0
  %1869 = vmatpush1.msra.mxu0 0.0
  %1870 = vmatprep.subr.mxu0 0.0
  %1871 = vmatpush1.msra.mxu0 0.0
  %1872 = vmatprep.subr.mxu0 0.0
  %1873 = vmatpush1.msra.mxu0 0.0
  %1874 = vmatprep.subr.mxu0 0.0
  %1875 = vmatpush1.msra.mxu0 0.0
  %1876 = vmatprep.subr.mxu0 0.0
  %1877 = vmatpush1.msra.mxu0 0.0
  %1878 = vmatprep.subr.mxu0 0.0
  %1879 = vmatpush1.msra.mxu0 0.0
  %1880 = vmatprep.subr.mxu0 0.0
  %1881 = vmatpush1.msra.mxu0 0.0
  %1882 = vmatprep.subr.mxu0 0.0
  %1883 = vmatpush1.msra.mxu0 0.0
  %1884 = vmatprep.subr.mxu0 0.0
  %1885 = vmatpush1.msra.mxu0 0.0
  %1886 = vmatprep.subr.mxu0 0.0
  %1887 = vmatpush1.msra.mxu0 0.0
  %1888 = vmatprep.subr.mxu0 0.0
  %1889 = vmatpush1.msra.mxu0 0.0
  %1890 = vmatprep.subr.mxu0 0.0
  %v1891 = vand.u32 %v1146, 4294901760
  %v1892 = vsub.f32 %v1146, %v1891
  %1893 = vmatpush1.msra.mxu0 %v1892
  %1894 = vmatprep.subr.mxu0 0.0
  %v1895 = vand.u32 %v74, 4294901760
  %v1896 = vsub.f32 %v74, %v1895
  %1897 = vmatpush1.msra.mxu0 %v1896
  %1898 = vmatprep.subr.mxu0 0.0
  %1899 = vmatpush2.msra.mxu0 0.0
  %1900 = vmatprep.subr.mxu0 0.0
  %1901 = vmatpush2.msra.mxu0 0.0
  %1902 = vmatprep.subr.mxu0 0.0
  %1903 = vmatpush2.msra.mxu0 0.0
  %1904 = vmatprep.subr.mxu0 0.0
  %1905 = vmatpush2.msra.mxu0 0.0
  %1906 = vmatprep.subr.mxu0 0.0
  %1907 = vmatpush2.msra.mxu0 0.0
  %1908 = vmatprep.subr.mxu0 0.0
  %1909 = vmatpush2.msra.mxu0 0.0
  %1910 = vmatprep.subr.mxu0 0.0
  %1911 = vmatpush2.msra.mxu0 0.0
  %1912 = vmatprep.subr.mxu0 0.0
  %1913 = vmatpush2.msra.mxu0 0.0
  %1914 = vmatprep.subr.mxu0 0.0
  %1915 = vmatpush2.msra.mxu0 0.0
  %1916 = vmatprep.subr.mxu0 0.0
  %1917 = vmatpush2.msra.mxu0 0.0
  %1918 = vmatprep.subr.mxu0 0.0
  %1919 = vmatpush2.msra.mxu0 0.0
  %1920 = vmatprep.subr.mxu0 0.0
  %1921 = vmatpush2.msra.mxu0 0.0
  %1922 = vmatprep.subr.mxu0 0.0
  %1923 = vmatpush2.msra.mxu0 0.0
  %1924 = vmatprep.subr.mxu0 0.0
  %1925 = vmatpush2.msra.mxu0 0.0
  %1926 = vmatprep.subr.mxu0 0.0
  %1927 = vmatpush2.msra.mxu0 0.0
  %1928 = vmatprep.subr.mxu0 0.0
  %1929 = vmatpush2.msra.mxu0 0.0
  %1930 = vmatprep.mubr.f32.mxu0 0.0
  %v1931 = vand.u32 %v82, 4294901760
  %v1932 = vsub.f32 %v82, %v1931
  %1933 = vmatmul.mubr.f32.gmra.mxu0 %v1932
  %v1934 = vpop.f32.mrf.mxu0
  %v1935 = vadd.f32 %v1853, %v1934
  %v1936 = vpop.f32.mrf.mxu0
  %1937 = vmatprep.mubr.f32.mxu0 0.0
  %v1938 = vand.u32 %v85, 4294901760
  %v1939 = vsub.f32 %v85, %v1938
  %1940 = vmatmul.mubr.f32.gmra.mxu0 %v1939
  %v1941 = vpop.f32.mrf.mxu0
  %v1942 = vadd.f32 %v1859, %v1941
  %v1943 = vpop.f32.mrf.mxu0
  %1944 = vdwg.mxu0
  %1945 = vmatprep.subr.mxu0 0.0
  %1946 = vmatpush1.msra.mxu0 0.0
  %1947 = vmatprep.subr.mxu0 0.0
  %1948 = vmatpush1.msra.mxu0 0.0
  %1949 = vmatprep.subr.mxu0 0.0
  %1950 = vmatpush1.msra.mxu0 0.0
  %1951 = vmatprep.subr.mxu0 0.0
  %1952 = vmatpush1.msra.mxu0 0.0
  %1953 = vmatprep.subr.mxu0 0.0
  %1954 = vmatpush1.msra.mxu0 0.0
  %1955 = vmatprep.subr.mxu0 0.0
  %1956 = vmatpush1.msra.mxu0 0.0
  %1957 = vmatprep.subr.mxu0 0.0
  %1958 = vmatpush1.msra.mxu0 0.0
  %1959 = vmatprep.subr.mxu0 0.0
  %1960 = vmatpush1.msra.mxu0 0.0
  %1961 = vmatprep.subr.mxu0 0.0
  %1962 = vmatpush1.msra.mxu0 0.0
  %1963 = vmatprep.subr.mxu0 0.0
  %1964 = vmatpush1.msra.mxu0 0.0
  %1965 = vmatprep.subr.mxu0 0.0
  %1966 = vmatpush1.msra.mxu0 0.0
  %1967 = vmatprep.subr.mxu0 0.0
  %1968 = vmatpush1.msra.mxu0 0.0
  %1969 = vmatprep.subr.mxu0 0.0
  %1970 = vmatpush1.msra.mxu0 0.0
  %1971 = vmatprep.subr.mxu0 0.0
  %1972 = vmatpush1.msra.mxu0 0.0
  %1973 = vmatprep.subr.mxu0 0.0
  %v1974 = vand.u32 %v1146, 4294901760
  %1975 = vmatpush1.msra.mxu0 %v1974
  %1976 = vmatprep.subr.mxu0 0.0
  %v1977 = vand.u32 %v74, 4294901760
  %1978 = vmatpush1.msra.mxu0 %v1977
  %1979 = vmatprep.subr.mxu0 0.0
  %1980 = vmatpush2.msra.mxu0 0.0
  %1981 = vmatprep.subr.mxu0 0.0
  %1982 = vmatpush2.msra.mxu0 0.0
  %1983 = vmatprep.subr.mxu0 0.0
  %1984 = vmatpush2.msra.mxu0 0.0
  %1985 = vmatprep.subr.mxu0 0.0
  %1986 = vmatpush2.msra.mxu0 0.0
  %1987 = vmatprep.subr.mxu0 0.0
  %1988 = vmatpush2.msra.mxu0 0.0
  %1989 = vmatprep.subr.mxu0 0.0
  %1990 = vmatpush2.msra.mxu0 0.0
  %1991 = vmatprep.subr.mxu0 0.0
  %1992 = vmatpush2.msra.mxu0 0.0
  %1993 = vmatprep.subr.mxu0 0.0
  %1994 = vmatpush2.msra.mxu0 0.0
  %1995 = vmatprep.subr.mxu0 0.0
  %1996 = vmatpush2.msra.mxu0 0.0
  %1997 = vmatprep.subr.mxu0 0.0
  %1998 = vmatpush2.msra.mxu0 0.0
  %1999 = vmatprep.subr.mxu0 0.0
  %2000 = vmatpush2.msra.mxu0 0.0
  %2001 = vmatprep.subr.mxu0 0.0
  %2002 = vmatpush2.msra.mxu0 0.0
  %2003 = vmatprep.subr.mxu0 0.0
  %2004 = vmatpush2.msra.mxu0 0.0
  %2005 = vmatprep.subr.mxu0 0.0
  %2006 = vmatpush2.msra.mxu0 0.0
  %2007 = vmatprep.subr.mxu0 0.0
  %2008 = vmatpush2.msra.mxu0 0.0
  %2009 = vmatprep.subr.mxu0 0.0
  %2010 = vmatpush2.msra.mxu0 0.0
  %2011 = vmatprep.mubr.f32.mxu0 0.0
  %v2012 = vand.u32 %v82, 4294901760
  %v2013 = vsub.f32 %v82, %v2012
  %v2014 = vand.u32 %v2013, 4294901760
  %2015 = vmatmul.mubr.f32.gmra.mxu0 %v2014
  %v2016 = vpop.f32.mrf.mxu0
  %v2017 = vadd.f32 %v1935, %v2016
  %v2018 = vpop.f32.mrf.mxu0
  %2019 = vmatprep.mubr.f32.mxu0 0.0
  %v2020 = vand.u32 %v85, 4294901760
  %v2021 = vsub.f32 %v85, %v2020
  %v2022 = vand.u32 %v2021, 4294901760
  %2023 = vmatmul.mubr.f32.gmra.mxu0 %v2022
  %v2024 = vpop.f32.mrf.mxu0
  %v2025 = vadd.f32 %v1942, %v2024
  %v2026 = vpop.f32.mrf.mxu0
  %2027 = vdwg.mxu0
  %2028 = vmatprep.subr.mxu0 0.0
  %2029 = vmatpush1.msra.mxu0 0.0
  %2030 = vmatprep.subr.mxu0 0.0
  %2031 = vmatpush1.msra.mxu0 0.0
  %2032 = vmatprep.subr.mxu0 0.0
  %2033 = vmatpush1.msra.mxu0 0.0
  %2034 = vmatprep.subr.mxu0 0.0
  %2035 = vmatpush1.msra.mxu0 0.0
  %2036 = vmatprep.subr.mxu0 0.0
  %2037 = vmatpush1.msra.mxu0 0.0
  %2038 = vmatprep.subr.mxu0 0.0
  %2039 = vmatpush1.msra.mxu0 0.0
  %2040 = vmatprep.subr.mxu0 0.0
  %2041 = vmatpush1.msra.mxu0 0.0
  %2042 = vmatprep.subr.mxu0 0.0
  %2043 = vmatpush1.msra.mxu0 0.0
  %2044 = vmatprep.subr.mxu0 0.0
  %2045 = vmatpush1.msra.mxu0 0.0
  %2046 = vmatprep.subr.mxu0 0.0
  %2047 = vmatpush1.msra.mxu0 0.0
  %2048 = vmatprep.subr.mxu0 0.0
  %2049 = vmatpush1.msra.mxu0 0.0
  %2050 = vmatprep.subr.mxu0 0.0
  %2051 = vmatpush1.msra.mxu0 0.0
  %2052 = vmatprep.subr.mxu0 0.0
  %2053 = vmatpush1.msra.mxu0 0.0
  %2054 = vmatprep.subr.mxu0 0.0
  %2055 = vmatpush1.msra.mxu0 0.0
  %2056 = vmatprep.subr.mxu0 0.0
  %v2057 = vand.u32 %v1146, 4294901760
  %v2058 = vsub.f32 %v1146, %v2057
  %v2059 = vand.u32 %v2058, 4294901760
  %2060 = vmatpush1.msra.mxu0 %v2059
  %2061 = vmatprep.subr.mxu0 0.0
  %v2062 = vand.u32 %v74, 4294901760
  %v2063 = vsub.f32 %v74, %v2062
  %v2064 = vand.u32 %v2063, 4294901760
  %2065 = vmatpush1.msra.mxu0 %v2064
  %2066 = vmatprep.subr.mxu0 0.0
  %2067 = vmatpush2.msra.mxu0 0.0
  %2068 = vmatprep.subr.mxu0 0.0
  %2069 = vmatpush2.msra.mxu0 0.0
  %2070 = vmatprep.subr.mxu0 0.0
  %2071 = vmatpush2.msra.mxu0 0.0
  %2072 = vmatprep.subr.mxu0 0.0
  %2073 = vmatpush2.msra.mxu0 0.0
  %2074 = vmatprep.subr.mxu0 0.0
  %2075 = vmatpush2.msra.mxu0 0.0
  %2076 = vmatprep.subr.mxu0 0.0
  %2077 = vmatpush2.msra.mxu0 0.0
  %2078 = vmatprep.subr.mxu0 0.0
  %2079 = vmatpush2.msra.mxu0 0.0
  %2080 = vmatprep.subr.mxu0 0.0
  %2081 = vmatpush2.msra.mxu0 0.0
  %2082 = vmatprep.subr.mxu0 0.0
  %2083 = vmatpush2.msra.mxu0 0.0
  %2084 = vmatprep.subr.mxu0 0.0
  %2085 = vmatpush2.msra.mxu0 0.0
  %2086 = vmatprep.subr.mxu0 0.0
  %2087 = vmatpush2.msra.mxu0 0.0
  %2088 = vmatprep.subr.mxu0 0.0
  %2089 = vmatpush2.msra.mxu0 0.0
  %2090 = vmatprep.subr.mxu0 0.0
  %2091 = vmatpush2.msra.mxu0 0.0
  %2092 = vmatprep.subr.mxu0 0.0
  %2093 = vmatpush2.msra.mxu0 0.0
  %2094 = vmatprep.subr.mxu0 0.0
  %2095 = vmatpush2.msra.mxu0 0.0
  %2096 = vmatprep.subr.mxu0 0.0
  %2097 = vmatpush2.msra.mxu0 0.0
  %2098 = vmatprep.mubr.f32.mxu0 0.0
  %v2099 = vand.u32 %v82, 4294901760
  %2100 = vmatmul.mubr.f32.gmra.mxu0 %v2099
  %v2101 = vpop.f32.mrf.mxu0
  %v2102 = vadd.f32 %v2017, %v2101
  %v2103 = vpop.f32.mrf.mxu0
  %2104 = vmatprep.mubr.f32.mxu0 0.0
  %v2105 = vand.u32 %v85, 4294901760
  %2106 = vmatmul.mubr.f32.gmra.mxu0 %v2105
  %v2107 = vpop.f32.mrf.mxu0
  %v2108 = vadd.f32 %v2025, %v2107
  %v2109 = vpop.f32.mrf.mxu0
  %2110 = vdwg.mxu0
  %2111 = vmatprep.subr.mxu0 0.0
  %2112 = vmatpush1.msra.mxu0 0.0
  %2113 = vmatprep.subr.mxu0 0.0
  %2114 = vmatpush1.msra.mxu0 0.0
  %2115 = vmatprep.subr.mxu0 0.0
  %2116 = vmatpush1.msra.mxu0 0.0
  %2117 = vmatprep.subr.mxu0 0.0
  %2118 = vmatpush1.msra.mxu0 0.0
  %2119 = vmatprep.subr.mxu0 0.0
  %2120 = vmatpush1.msra.mxu0 0.0
  %2121 = vmatprep.subr.mxu0 0.0
  %2122 = vmatpush1.msra.mxu0 0.0
  %2123 = vmatprep.subr.mxu0 0.0
  %2124 = vmatpush1.msra.mxu0 0.0
  %2125 = vmatprep.subr.mxu0 0.0
  %2126 = vmatpush1.msra.mxu0 0.0
  %2127 = vmatprep.subr.mxu0 0.0
  %2128 = vmatpush1.msra.mxu0 0.0
  %2129 = vmatprep.subr.mxu0 0.0
  %2130 = vmatpush1.msra.mxu0 0.0
  %2131 = vmatprep.subr.mxu0 0.0
  %2132 = vmatpush1.msra.mxu0 0.0
  %2133 = vmatprep.subr.mxu0 0.0
  %2134 = vmatpush1.msra.mxu0 0.0
  %2135 = vmatprep.subr.mxu0 0.0
  %2136 = vmatpush1.msra.mxu0 0.0
  %2137 = vmatprep.subr.mxu0 0.0
  %2138 = vmatpush1.msra.mxu0 0.0
  %2139 = vmatprep.subr.mxu0 0.0
  %v2140 = vand.u32 %v1146, 4294901760
  %2141 = vmatpush1.msra.mxu0 %v2140
  %2142 = vmatprep.subr.mxu0 0.0
  %v2143 = vand.u32 %v74, 4294901760
  %2144 = vmatpush1.msra.mxu0 %v2143
  %2145 = vmatprep.subr.mxu0 0.0
  %2146 = vmatpush2.msra.mxu0 0.0
  %2147 = vmatprep.subr.mxu0 0.0
  %2148 = vmatpush2.msra.mxu0 0.0
  %2149 = vmatprep.subr.mxu0 0.0
  %2150 = vmatpush2.msra.mxu0 0.0
  %2151 = vmatprep.subr.mxu0 0.0
  %2152 = vmatpush2.msra.mxu0 0.0
  %2153 = vmatprep.subr.mxu0 0.0
  %2154 = vmatpush2.msra.mxu0 0.0
  %2155 = vmatprep.subr.mxu0 0.0
  %2156 = vmatpush2.msra.mxu0 0.0
  %2157 = vmatprep.subr.mxu0 0.0
  %2158 = vmatpush2.msra.mxu0 0.0
  %2159 = vmatprep.subr.mxu0 0.0
  %2160 = vmatpush2.msra.mxu0 0.0
  %2161 = vmatprep.subr.mxu0 0.0
  %2162 = vmatpush2.msra.mxu0 0.0
  %2163 = vmatprep.subr.mxu0 0.0
  %2164 = vmatpush2.msra.mxu0 0.0
  %2165 = vmatprep.subr.mxu0 0.0
  %2166 = vmatpush2.msra.mxu0 0.0
  %2167 = vmatprep.subr.mxu0 0.0
  %2168 = vmatpush2.msra.mxu0 0.0
  %2169 = vmatprep.subr.mxu0 0.0
  %2170 = vmatpush2.msra.mxu0 0.0
  %2171 = vmatprep.subr.mxu0 0.0
  %2172 = vmatpush2.msra.mxu0 0.0
  %2173 = vmatprep.subr.mxu0 0.0
  %2174 = vmatpush2.msra.mxu0 0.0
  %2175 = vmatprep.subr.mxu0 0.0
  %2176 = vmatpush2.msra.mxu0 0.0
  %2177 = vmatprep.mubr.f32.mxu0 0.0
  %v2178 = vand.u32 %v82, 4294901760
  %2179 = vmatmul.mubr.f32.gmra.mxu0 %v2178
  %v2180 = vpop.f32.mrf.mxu0
  %v2181 = vadd.f32 %v2102, %v2180
  %v2182 = vpop.f32.mrf.mxu0
  %2183 = vmatprep.mubr.f32.mxu0 0.0
  %v2184 = vand.u32 %v85, 4294901760
  %2185 = vmatmul.mubr.f32.gmra.mxu0 %v2184
  %v2186 = vpop.f32.mrf.mxu0
  %v2187 = vadd.f32 %v2108, %v2186
  %v2188 = vpop.f32.mrf.mxu0
  %2189 = vdwg.mxu0
  %2190 = vst [vmem:[%s2] sm:$0xff] %v626
  %2191 = vst [vmem:[%s2 + $0x8] sm:$0xff] %v628
  %vm2192 = vcmask 654336
  %2193 = vst.msk [vmem:[%s2 + $0x10] sm:$0xff] %vm2192, %v1130
  %2194 = vst [vmem:[%s2 + $0x18] sm:$0x3f] %v633
  %2195 = vst [vmem:[%s2 + $0x20] sm:$0x3f] %v635
  %vm2196 = vcmask 652288
  %2197 = vst.msk [vmem:[%s2 + $0x28] sm:$0x3f] %vm2196, %v1136
  %2198 = vst [vmem:[%s2 + $0x30] sm:$0xff] %v1677
  %2199 = vst [vmem:[%s2 + $0x38] sm:$0xff] %v1679
  %2200 = vst.msk [vmem:[%s2 + $0x40] sm:$0xff] %vm2192, %v2181
  %2201 = vst [vmem:[%s2 + $0x48] sm:$0x3f] %v1684
  %2202 = vst [vmem:[%s2 + $0x50] sm:$0x3f] %v1686
  %2203 = vst.msk [vmem:[%s2 + $0x58] sm:$0x3f] %vm2196, %v2187
  // Predicated region
  $region10: #{input_parser.1} parent=0 // pred_check
    _
  $region11: #{input_parser.1} parent=0 // pred_check_branch
    %2205 = sbr.rel (0) target = $region13
  $region12: #{input_parser.1} parent=0 // pred_region
    _
  $region13: #{input_parser.1} parent=0 // pred_fallthru
    _
  // Predicated region
  $region14: #{input_parser.1} parent=0 // pred_check
    _
  $region15: #{input_parser.1} parent=0 // pred_check_branch
    %2207 = sbr.rel (0) target = $region17
  $region16: #{input_parser.1} parent=0 // pred_region
    _
  $region17: #{input_parser.1} parent=0 // pred_fallthru
    _

</llo_original>
